<compile_context>
chip_gen: v7x
topology: tpu7x:2x2x1
jax: 0.10.0
libtpu: 0.0.40
codegen_flags: <defaults>
</compile_context>

<pallas_src>
import functools

import jax
import jax.numpy as jnp
from jax.experimental import pallas as pl
from jax.experimental.pallas import tpu as pltpu

INPUT_DIM = 784
HIDDEN_DIM = 400
LATENT_DIM = 2


def _round_up(n, m):
    return ((n + m - 1) // m) * m


def _vae_kernel(x_ref, eps_ref,
                w1_ref, b1_ref,
                wh_ref, bh_ref,          # fused [fc_mu | fc_var] weights/bias
                wd1_ref, bd1_ref,
                wd2_ref, bd2_ref,
                recon_ref, heads_ref):
    x = x_ref[...]                                     # (TM, 784) f32

    # ---- encoder: Linear(784, 400) + ReLU (MXU) ----
    h = jnp.dot(x, w1_ref[...], preferred_element_type=jnp.float32) + b1_ref[...]
    h = jnp.maximum(h, 0.0)

    # ---- fused latent heads: one (400, 4) matmul, then lane slices ----
    heads = jnp.dot(h, wh_ref[...], preferred_element_type=jnp.float32) + bh_ref[...]
    mu = heads[:, 0:LATENT_DIM]                        # (TM, 2)
    log_var = heads[:, LATENT_DIM:2 * LATENT_DIM]      # (TM, 2)

    # ---- reparameterize: z = mu + eps * exp(0.5 * log_var) ----
    std = jnp.exp(0.5 * log_var)
    z = mu + eps_ref[...] * std                        # (TM, 2)

    # ---- decoder layer 1: Linear(2, 400) + ReLU as a VPU outer product ----
    # K=2 contraction -> two broadcast FMAs instead of a nearly-empty MXU push.
    hd = (z[:, 0:1] * wd1_ref[0:1, :]
          + z[:, 1:2] * wd1_ref[1:2, :]
          + bd1_ref[...])                              # (TM, 400)
    hd = jnp.maximum(hd, 0.0)

    # ---- decoder layer 2: Linear(400, 784) + Sigmoid (MXU + EUP) ----
    logits = jnp.dot(hd, wd2_ref[...], preferred_element_type=jnp.float32) + bd2_ref[...]

    recon_ref[...] = jax.nn.sigmoid(logits)
    heads_ref[...] = heads


@jax.jit
def vae_forward(x_nchw, eps, params):
    """Runs the VAE forward pass. Returns (reconstruction, mu, log_var)."""
    b = x_nchw.shape[0]
    x = x_nchw.reshape(b, -1).astype(jnp.float32)      # (B, 784)
    eps = eps.astype(jnp.float32)

    (w1, b1, wmu, bmu, wvar, bvar, wd1, bd1, wd2, bd2) = params

    # Fuse the two latent heads into one (400, 4) weight / (1, 4) bias.
    wh = jnp.concatenate([wmu, wvar], axis=1)          # (400, 4)
    bh = jnp.concatenate([bmu, bvar], axis=1)          # (1, 4)

    # Batch tiling: TM rows per grid step (sublane-aligned); pad batch if needed.
    tm = min(256, _round_up(b, 8))
    b_pad = _round_up(b, tm)
    if b_pad != b:
        x = jnp.pad(x, ((0, b_pad - b), (0, 0)))
        eps = jnp.pad(eps, ((0, b_pad - b), (0, 0)))
    n_blocks = b_pad // tm

    def tiled(shape):
        return pl.BlockSpec(shape, lambda i: (i, 0))

    def resident(shape):
        return pl.BlockSpec(shape, lambda i: (0, 0))

    in_specs = [
        tiled((tm, INPUT_DIM)),            # x
        tiled((tm, LATENT_DIM)),           # eps
        resident(w1.shape), resident(b1.shape),
        resident(wh.shape), resident(bh.shape),
        resident(wd1.shape), resident(bd1.shape),
        resident(wd2.shape), resident(bd2.shape),
    ]
    out_shapes = (
        jax.ShapeDtypeStruct((b_pad, INPUT_DIM), jnp.float32),       # recon
        jax.ShapeDtypeStruct((b_pad, 2 * LATENT_DIM), jnp.float32),  # [mu | log_var]
    )
    out_specs = (
        tiled((tm, INPUT_DIM)),
        tiled((tm, 2 * LATENT_DIM)),
    )

    weight_bytes = sum(int(a.size) * 4 for a in (w1, b1, wh, bh, wd1, bd1, wd2, bd2))
    io_bytes = 4 * b_pad * (INPUT_DIM + LATENT_DIM + INPUT_DIM + 2 * LATENT_DIM)
    cost = pl.CostEstimate(
        flops=2 * b_pad * (INPUT_DIM * HIDDEN_DIM
                           + HIDDEN_DIM * 2 * LATENT_DIM
                           + LATENT_DIM * HIDDEN_DIM
                           + HIDDEN_DIM * INPUT_DIM),
        transcendentals=b_pad * (LATENT_DIM + INPUT_DIM),
        bytes_accessed=weight_bytes + io_bytes,
    )

    recon, heads = pl.pallas_call(
        _vae_kernel,
        out_shape=out_shapes,
        grid_spec=pltpu.PrefetchScalarGridSpec(
            num_scalar_prefetch=0,
            grid=(n_blocks,),
            in_specs=in_specs,
            out_specs=out_specs,
        ),
        compiler_params=pltpu.CompilerParams(
            dimension_semantics=("parallel",),
        ),
        cost_estimate=cost,
    )(x, eps, w1, b1, wh, bh, wd1, bd1, wd2, bd2)

    recon = recon[:b]
    mu = heads[:b, 0:LATENT_DIM]
    log_var = heads[:b, LATENT_DIM:2 * LATENT_DIM]
    return recon, mu, log_var


def init_params(key):
    """Deterministic init mirroring nn.Linear default (uniform +/- 1/sqrt(fan_in)).

    Weights are stored as (in_features, out_features)."""
    def linear(k, fan_in, fan_out):
        kw, kb = jax.random.split(k)
        bound = 1.0 / jnp.sqrt(jnp.float32(fan_in))
        w = jax.random.uniform(kw, (fan_in, fan_out), jnp.float32, -bound, bound)
        b = jax.random.uniform(kb, (1, fan_out), jnp.float32, -bound, bound)
        return w, b

    k1, k2, k3, k4, k5 = jax.random.split(key, 5)
    w1, b1 = linear(k1, INPUT_DIM, HIDDEN_DIM)       # encoder Linear(784, 400)
    wmu, bmu = linear(k2, HIDDEN_DIM, LATENT_DIM)    # fc_mu
    wvar, bvar = linear(k3, HIDDEN_DIM, LATENT_DIM)  # fc_var
    wd1, bd1 = linear(k4, LATENT_DIM, HIDDEN_DIM)    # decoder Linear(2, 400)
    wd2, bd2 = linear(k5, HIDDEN_DIM, INPUT_DIM)     # decoder Linear(400, 784)
    return (w1, b1, wmu, bmu, wvar, bvar, wd1, bd1, wd2, bd2)


def reference_forward(x_nchw, eps, params):
    """Pure-JAX reference of the PyTorch forward, for validation."""
    (w1, b1, wmu, bmu, wvar, bvar, wd1, bd1, wd2, bd2) = params
    x = x_nchw.reshape(x_nchw.shape[0], -1).astype(jnp.float32)
    h = jnp.maximum(x @ w1 + b1, 0.0)
    mu = h @ wmu + bmu
    log_var = h @ wvar + bvar
    z = mu + eps * jnp.exp(0.5 * log_var)
    hd = jnp.maximum(z @ wd1 + bd1, 0.0)
    recon = jax.nn.sigmoid(hd @ wd2 + bd2)
    return recon, mu, log_var


if __name__ == "__main__":
    key = jax.random.PRNGKey(0)
    k_params, k_x, k_eps = jax.random.split(key, 3)

    params = init_params(k_params)

    batch = 8
    # MNIST-like NCHW input; forward flattens it to (batch, 784).
    x = jax.random.uniform(k_x, (batch, 1, 28, 28), jnp.float32)
    # Deterministic eps for the reparameterization trick (randn_like in torch).
    eps = jax.random.normal(k_eps, (batch, LATENT_DIM), jnp.float32)

    recon, mu, log_var = vae_forward(x, eps, params)
    jax.block_until_ready((recon, mu, log_var))

    r_ref, mu_ref, lv_ref = reference_forward(x, eps, params)
    assert recon.shape == (batch, INPUT_DIM)
    assert mu.shape == (batch, LATENT_DIM)
    assert log_var.shape == (batch, LATENT_DIM)
    assert jnp.allclose(recon, r_ref, atol=1e-5, rtol=1e-5)
    assert jnp.allclose(mu, mu_ref, atol=1e-5, rtol=1e-5)
    assert jnp.allclose(log_var, lv_ref, atol=1e-5, rtol=1e-5)

    print("KERNEL_OK")
</pallas_src>

<mosaic_0001>
module attributes {stable_mosaic.version = 11 : i64} {
  func.func @_vae_kernel(%arg0: i32, %arg1: memref<8x784xf32, #tpu.memory_space<vmem>>, %arg2: memref<8x2xf32, #tpu.memory_space<vmem>>, %arg3: memref<784x400xf32, #tpu.memory_space<vmem>>, %arg4: memref<1x400xf32, #tpu.memory_space<vmem>>, %arg5: memref<400x4xf32, #tpu.memory_space<vmem>>, %arg6: memref<1x4xf32, #tpu.memory_space<vmem>>, %arg7: memref<2x400xf32, #tpu.memory_space<vmem>>, %arg8: memref<1x400xf32, #tpu.memory_space<vmem>>, %arg9: memref<400x784xf32, #tpu.memory_space<vmem>>, %arg10: memref<1x784xf32, #tpu.memory_space<vmem>>, %arg11: memref<8x784xf32, #tpu.memory_space<vmem>>, %arg12: memref<8x4xf32, #tpu.memory_space<vmem>>) attributes {dimension_semantics = [#tpu.dimension_semantics<parallel>], iteration_bounds = array<i64: 1>, scalar_prefetch = 0 : i64, scratch_operands = 0 : i64, tpu.core_type = #tpu.core_type<tc>, window_params = [{transform_indices = @transform_0, window_bounds = array<i64: 8, 784>}, {transform_indices = @transform_1, window_bounds = array<i64: 8, 2>}, {pipeline_mode = #tpu.pipeline_mode<synchronous>, transform_indices = @transform_2, window_bounds = array<i64: 784, 400>}, {pipeline_mode = #tpu.pipeline_mode<synchronous>, transform_indices = @transform_3, window_bounds = array<i64: 1, 400>}, {pipeline_mode = #tpu.pipeline_mode<synchronous>, transform_indices = @transform_4, window_bounds = array<i64: 400, 4>}, {pipeline_mode = #tpu.pipeline_mode<synchronous>, transform_indices = @transform_5, window_bounds = array<i64: 1, 4>}, {pipeline_mode = #tpu.pipeline_mode<synchronous>, transform_indices = @transform_6, window_bounds = array<i64: 2, 400>}, {pipeline_mode = #tpu.pipeline_mode<synchronous>, transform_indices = @transform_7, window_bounds = array<i64: 1, 400>}, {pipeline_mode = #tpu.pipeline_mode<synchronous>, transform_indices = @transform_8, window_bounds = array<i64: 400, 784>}, {pipeline_mode = #tpu.pipeline_mode<synchronous>, transform_indices = @transform_9, window_bounds = array<i64: 1, 784>}, {transform_indices = @transform_10, window_bounds = array<i64: 8, 784>}, {transform_indices = @transform_11, window_bounds = array<i64: 8, 4>}]} {
    %c0 = arith.constant 0 : index
    %c0_0 = arith.constant 0 : index
    %0 = vector.load %arg1[%c0, %c0_0] : memref<8x784xf32, #tpu.memory_space<vmem>>, vector<8x784xf32>
    %c0_1 = arith.constant 0 : index
    %c0_2 = arith.constant 0 : index
    %1 = vector.load %arg3[%c0_1, %c0_2] : memref<784x400xf32, #tpu.memory_space<vmem>>, vector<784x400xf32>
    %cst = arith.constant dense<0.000000e+00> : vector<8x400xf32>
    %2 = tpu.matmul %0, %1, %cst {dimension_numbers = #tpu.dot_dimension_numbers<[1], [0], [0], [1], [0, 0, 1, 1], [], []>} : vector<8x784xf32>, vector<784x400xf32>, vector<8x400xf32> -> vector<8x400xf32>
    %c0_3 = arith.constant 0 : index
    %c0_4 = arith.constant 0 : index
    %3 = vector.load %arg4[%c0_3, %c0_4] : memref<1x400xf32, #tpu.memory_space<vmem>>, vector<1x400xf32>
    %4 = vector.broadcast %3 : vector<1x400xf32> to vector<8x400xf32>
    %5 = arith.addf %2, %4 : vector<8x400xf32>
    %cst_5 = arith.constant 0.000000e+00 : f32
    %6 = vector.broadcast %cst_5 : f32 to vector<8x400xf32>
    %7 = arith.maximumf %5, %6 : vector<8x400xf32>
    %c0_6 = arith.constant 0 : index
    %c0_7 = arith.constant 0 : index
    %8 = vector.load %arg5[%c0_6, %c0_7] : memref<400x4xf32, #tpu.memory_space<vmem>>, vector<400x4xf32>
    %cst_8 = arith.constant dense<0.000000e+00> : vector<8x4xf32>
    %9 = tpu.matmul %7, %8, %cst_8 {dimension_numbers = #tpu.dot_dimension_numbers<[1], [0], [0], [1], [0, 0, 1, 1], [], []>} : vector<8x400xf32>, vector<400x4xf32>, vector<8x4xf32> -> vector<8x4xf32>
    %c0_9 = arith.constant 0 : index
    %c0_10 = arith.constant 0 : index
    %10 = vector.load %arg6[%c0_9, %c0_10] : memref<1x4xf32, #tpu.memory_space<vmem>>, vector<1x4xf32>
    %11 = vector.broadcast %10 : vector<1x4xf32> to vector<8x4xf32>
    %12 = arith.addf %9, %11 : vector<8x4xf32>
    %13 = vector.extract_strided_slice %12 {offsets = [0, 0], sizes = [8, 2], strides = [1, 1]} : vector<8x4xf32> to vector<8x2xf32>
    %14 = vector.extract_strided_slice %12 {offsets = [0, 2], sizes = [8, 2], strides = [1, 1]} : vector<8x4xf32> to vector<8x2xf32>
    %cst_11 = arith.constant 5.000000e-01 : f32
    %15 = vector.broadcast %cst_11 : f32 to vector<8x2xf32>
    %16 = arith.mulf %15, %14 : vector<8x2xf32>
    %17 = math.exp %16 : vector<8x2xf32>
    %c0_12 = arith.constant 0 : index
    %c0_13 = arith.constant 0 : index
    %18 = vector.load %arg2[%c0_12, %c0_13] : memref<8x2xf32, #tpu.memory_space<vmem>>, vector<8x2xf32>
    %19 = arith.mulf %18, %17 : vector<8x2xf32>
    %20 = arith.addf %13, %19 : vector<8x2xf32>
    %21 = vector.extract_strided_slice %20 {offsets = [0, 0], sizes = [8, 1], strides = [1, 1]} : vector<8x2xf32> to vector<8x1xf32>
    %c0_14 = arith.constant 0 : index
    %c0_15 = arith.constant 0 : index
    %22 = vector.load %arg7[%c0_14, %c0_15] : memref<2x400xf32, #tpu.memory_space<vmem>>, vector<1x400xf32>
    %23 = vector.broadcast %21 : vector<8x1xf32> to vector<8x400xf32>
    %24 = vector.broadcast %22 : vector<1x400xf32> to vector<8x400xf32>
    %25 = arith.mulf %23, %24 : vector<8x400xf32>
    %26 = vector.extract_strided_slice %20 {offsets = [0, 1], sizes = [8, 1], strides = [1, 1]} : vector<8x2xf32> to vector<8x1xf32>
    %c1 = arith.constant 1 : index
    %c0_16 = arith.constant 0 : index
    %27 = vector.load %arg7[%c1, %c0_16] : memref<2x400xf32, #tpu.memory_space<vmem>>, vector<1x400xf32>
    %28 = vector.broadcast %26 : vector<8x1xf32> to vector<8x400xf32>
    %29 = vector.broadcast %27 : vector<1x400xf32> to vector<8x400xf32>
    %30 = arith.mulf %28, %29 : vector<8x400xf32>
    %31 = arith.addf %25, %30 : vector<8x400xf32>
    %c0_17 = arith.constant 0 : index
    %c0_18 = arith.constant 0 : index
    %32 = vector.load %arg8[%c0_17, %c0_18] : memref<1x400xf32, #tpu.memory_space<vmem>>, vector<1x400xf32>
    %33 = vector.broadcast %32 : vector<1x400xf32> to vector<8x400xf32>
    %34 = arith.addf %31, %33 : vector<8x400xf32>
    %cst_19 = arith.constant 0.000000e+00 : f32
    %35 = vector.broadcast %cst_19 : f32 to vector<8x400xf32>
    %36 = arith.maximumf %34, %35 : vector<8x400xf32>
    %c0_20 = arith.constant 0 : index
    %c0_21 = arith.constant 0 : index
    %37 = vector.load %arg9[%c0_20, %c0_21] : memref<400x784xf32, #tpu.memory_space<vmem>>, vector<400x784xf32>
    %cst_22 = arith.constant dense<0.000000e+00> : vector<8x784xf32>
    %38 = tpu.matmul %36, %37, %cst_22 {dimension_numbers = #tpu.dot_dimension_numbers<[1], [0], [0], [1], [0, 0, 1, 1], [], []>} : vector<8x400xf32>, vector<400x784xf32>, vector<8x784xf32> -> vector<8x784xf32>
    %c0_23 = arith.constant 0 : index
    %c0_24 = arith.constant 0 : index
    %39 = vector.load %arg10[%c0_23, %c0_24] : memref<1x784xf32, #tpu.memory_space<vmem>>, vector<1x784xf32>
    %40 = vector.broadcast %39 : vector<1x784xf32> to vector<8x784xf32>
    %41 = arith.addf %38, %40 : vector<8x784xf32>
    %42 = arith.negf %41 : vector<8x784xf32>
    %43 = math.exp %42 : vector<8x784xf32>
    %cst_25 = arith.constant 1.000000e+00 : f32
    %44 = vector.broadcast %cst_25 : f32 to vector<8x784xf32>
    %45 = arith.addf %44, %43 : vector<8x784xf32>
    %46 = arith.divf %44, %45 : vector<8x784xf32>
    %c0_26 = arith.constant 0 : index
    %c0_27 = arith.constant 0 : index
    %47 = vector.load %arg11[%c0_26, %c0_27] : memref<8x784xf32, #tpu.memory_space<vmem>>, vector<8x784xf32>
    tpu.vector_store %arg11[%c0_26, %c0_27], %46 {strides = array<i32>} : memref<8x784xf32, #tpu.memory_space<vmem>>, vector<8x784xf32>,
    %c0_28 = arith.constant 0 : index
    %c0_29 = arith.constant 0 : index
    %48 = vector.load %arg12[%c0_28, %c0_29] : memref<8x4xf32, #tpu.memory_space<vmem>>, vector<8x4xf32>
    tpu.vector_store %arg12[%c0_28, %c0_29], %12 {strides = array<i32>} : memref<8x4xf32, #tpu.memory_space<vmem>>, vector<8x4xf32>,
    return
  }
  func.func @transform_0(%arg0: i32) -> (i32, i32) {
    %c0_i32 = arith.constant 0 : i32
    %c0_i32_0 = arith.constant 0 : i32
    return %arg0, %c0_i32 : i32, i32
  }
  func.func @transform_1(%arg0: i32) -> (i32, i32) {
    %c0_i32 = arith.constant 0 : i32
    %c0_i32_0 = arith.constant 0 : i32
    return %arg0, %c0_i32 : i32, i32
  }
  func.func @transform_2(%arg0: i32) -> (i32, i32) {
    %c0_i32 = arith.constant 0 : i32
    %c0_i32_0 = arith.constant 0 : i32
    %c0_i32_1 = arith.constant 0 : i32
    return %c0_i32, %c0_i32_0 : i32, i32
  }
  func.func @transform_3(%arg0: i32) -> (i32, i32) {
    %c0_i32 = arith.constant 0 : i32
    %c0_i32_0 = arith.constant 0 : i32
    %c0_i32_1 = arith.constant 0 : i32
    return %c0_i32, %c0_i32_0 : i32, i32
  }
  func.func @transform_4(%arg0: i32) -> (i32, i32) {
    %c0_i32 = arith.constant 0 : i32
    %c0_i32_0 = arith.constant 0 : i32
    %c0_i32_1 = arith.constant 0 : i32
    return %c0_i32, %c0_i32_0 : i32, i32
  }
  func.func @transform_5(%arg0: i32) -> (i32, i32) {
    %c0_i32 = arith.constant 0 : i32
    %c0_i32_0 = arith.constant 0 : i32
    %c0_i32_1 = arith.constant 0 : i32
    return %c0_i32, %c0_i32_0 : i32, i32
  }
  func.func @transform_6(%arg0: i32) -> (i32, i32) {
    %c0_i32 = arith.constant 0 : i32
    %c0_i32_0 = arith.constant 0 : i32
    %c0_i32_1 = arith.constant 0 : i32
    return %c0_i32, %c0_i32_0 : i32, i32
  }
  func.func @transform_7(%arg0: i32) -> (i32, i32) {
    %c0_i32 = arith.constant 0 : i32
    %c0_i32_0 = arith.constant 0 : i32
    %c0_i32_1 = arith.constant 0 : i32
    return %c0_i32, %c0_i32_0 : i32, i32
  }
  func.func @transform_8(%arg0: i32) -> (i32, i32) {
    %c0_i32 = arith.constant 0 : i32
    %c0_i32_0 = arith.constant 0 : i32
    %c0_i32_1 = arith.constant 0 : i32
    return %c0_i32, %c0_i32_0 : i32, i32
  }
  func.func @transform_9(%arg0: i32) -> (i32, i32) {
    %c0_i32 = arith.constant 0 : i32
    %c0_i32_0 = arith.constant 0 : i32
    %c0_i32_1 = arith.constant 0 : i32
    return %c0_i32, %c0_i32_0 : i32, i32
  }
  func.func @transform_10(%arg0: i32) -> (i32, i32) {
    %c0_i32 = arith.constant 0 : i32
    %c0_i32_0 = arith.constant 0 : i32
    return %arg0, %c0_i32 : i32, i32
  }
  func.func @transform_11(%arg0: i32) -> (i32, i32) {
    %c0_i32 = arith.constant 0 : i32
    %c0_i32_0 = arith.constant 0 : i32
    return %arg0, %c0_i32 : i32, i32
  }
}

</mosaic_0001>

<llo_original>
// kernel: vae_forward.1
$region0: #{vae_forward.1}
  #allocation0 [shape = 'u32[]', space=smem, size = 0x4, offset = 0x4, fixed_abs, tag = 'smem constant byte address 0x4 - core index']
  #allocation1 [shape = 'u32[144,128]{1,0:T(1,128)}', space=vmem, size = 0x12000, scoped, tag = 'internal scratch']
  %s0 = inlined_call_operand.vmem [shape: f32[8,784], index: 0, kind: input, shape index: {}]
  %s1 = inlined_call_operand.vmem [shape: f32[8,2], index: 1, kind: input, shape index: {}]
  %s2 = inlined_call_operand.vmem [shape: f32[784,400], index: 2, kind: input, shape index: {}]
  %s3 = inlined_call_operand.vmem [shape: f32[1,400], index: 3, kind: input, shape index: {}]
  %s4 = inlined_call_operand.vmem [shape: f32[400,4], index: 4, kind: input, shape index: {}]
  %s5 = inlined_call_operand.vmem [shape: f32[1,4], index: 5, kind: input, shape index: {}]
  %s6 = inlined_call_operand.vmem [shape: f32[2,400], index: 6, kind: input, shape index: {}]
  %s7 = inlined_call_operand.vmem [shape: f32[1,400], index: 7, kind: input, shape index: {}]
  %s8 = inlined_call_operand.vmem [shape: f32[400,784], index: 8, kind: input, shape index: {}]
  %s9 = inlined_call_operand.vmem [shape: f32[1,784], index: 9, kind: input, shape index: {}]
  %s10 = inlined_call_operand.hbm [shape: f32[8,784], index: 10, kind: output, shape index: {0}]
  %s11 = inlined_call_operand.vmem [shape: f32[8,4], index: 11, kind: output, shape index: {1}]
  %12 = xla_tuple %s10, %s11
  %s13 = sld [smem:[#allocation0]]
  $region58: #{vae_forward.1} parent=0
    _
  %s15 = ssub.s32 1, %s13
  %s16 = scalar_select 0, %s15, %s13
  $region1: #{vae_forward.1} parent=0
    #allocation2 [shape = 'u8[28672]{0}', space=vmem, size = 0x7000, scoped, tag = 'output window, operand 0, single buffered']
    #allocation3 [shape = 's32[1]{0}', space=sflag, size = 0x4, scoped, tag = 'scoped memory for vae_forward.1']
    %17 = vsyncpa [#allocation3], 0
    // Predicated region
    $region2: #{vae_forward.1} parent=1 // pred_check
      _
    $region3: #{vae_forward.1} parent=1 // pred_check_branch
      %19 = sbr.rel (0) target = $region5
    $region4: #{vae_forward.1} parent=1 // pred_region
      _
    $region5: #{vae_forward.1} parent=1 // pred_fallthru
      _
    // Predicated region
    $region6: #{vae_forward.1} parent=1 // pred_check
      _
    $region7: #{vae_forward.1} parent=1 // pred_check_branch
      %21 = sbr.rel (0) target = $region9
    $region8: #{vae_forward.1} parent=1 // pred_region
      _
    $region9: #{vae_forward.1} parent=1 // pred_fallthru
      _
    // Predicated region
    $region10: #{vae_forward.1} parent=1 // pred_check
      _
    $region11: #{vae_forward.1} parent=1 // pred_check_branch
      %23 = sbr.rel (0) target = $region13
    $region12: #{vae_forward.1} parent=1 // pred_region
      _
    $region13: #{vae_forward.1} parent=1 // pred_fallthru
      _
    // Predicated region
    $region14: #{vae_forward.1} parent=1 // pred_check
      _
    $region15: #{vae_forward.1} parent=1 // pred_check_branch
      %25 = sbr.rel (0) target = $region17
    $region16: #{vae_forward.1} parent=1 // pred_region
      _
    $region17: #{vae_forward.1} parent=1 // pred_fallthru
      _
    // Predicated region
    $region18: #{vae_forward.1} parent=1 // pred_check
      _
    $region19: #{vae_forward.1} parent=1 // pred_check_branch
      %27 = sbr.rel (0) target = $region21
    $region20: #{vae_forward.1} parent=1 // pred_region
      _
    $region21: #{vae_forward.1} parent=1 // pred_fallthru
      _
    // Predicated region
    $region22: #{vae_forward.1} parent=1 // pred_check
      _
    $region23: #{vae_forward.1} parent=1 // pred_check_branch
      %29 = sbr.rel (0) target = $region25
    $region24: #{vae_forward.1} parent=1 // pred_region
      _
    $region25: #{vae_forward.1} parent=1 // pred_fallthru
      _
    // Predicated region
    $region26: #{vae_forward.1} parent=1 // pred_check
      _
    $region27: #{vae_forward.1} parent=1 // pred_check_branch
      %31 = sbr.rel (0) target = $region29
    $region28: #{vae_forward.1} parent=1 // pred_region
      _
    $region29: #{vae_forward.1} parent=1 // pred_fallthru
      _
    // Predicated region
    $region30: #{vae_forward.1} parent=1 // pred_check
      _
    $region31: #{vae_forward.1} parent=1 // pred_check_branch
      %33 = sbr.rel (0) target = $region33
    $region32: #{vae_forward.1} parent=1 // pred_region
      _
    $region33: #{vae_forward.1} parent=1 // pred_fallthru
      _
    // Predicated region
    $region34: #{vae_forward.1} parent=1 // pred_check
      _
    $region35: #{vae_forward.1} parent=1 // pred_check_branch
      %35 = sbr.rel (0) target = $region37
    $region36: #{vae_forward.1} parent=1 // pred_region
      _
    $region37: #{vae_forward.1} parent=1 // pred_fallthru
      _
    // Predicated region
    $region38: #{vae_forward.1} parent=1 // pred_check
      _
    $region39: #{vae_forward.1} parent=1 // pred_check_branch
      %37 = sbr.rel (0) target = $region41
    $region40: #{vae_forward.1} parent=1 // pred_region
      _
    $region41: #{vae_forward.1} parent=1 // pred_fallthru
      _
    %v38 = vld [vmem:[%s0] sm:$0xff]
    %v39 = vld [vmem:[%s0 + $0x8] sm:$0xff]
    %v40 = vld [vmem:[%s0 + $0x10] sm:$0xff]
    %v41 = vld [vmem:[%s0 + $0x18] sm:$0xff]
    %v42 = vld [vmem:[%s0 + $0x20] sm:$0xff]
    %v43 = vld [vmem:[%s0 + $0x28] sm:$0xff]
    %v44 = vld [vmem:[%s0 + $0x30] sm:$0xff]
    %v45 = vld [vmem:[%s2] sm:$0xff]
    %v46 = vld [vmem:[%s2 + $0x8] sm:$0xff]
    %v47 = vld [vmem:[%s2 + $0x10] sm:$0xff]
    %v48 = vld [vmem:[%s2 + $0x18] sm:$0xff]
    %v49 = vld [vmem:[%s2 + $0x20] sm:$0xff]
    %v50 = vld [vmem:[%s2 + $0x28] sm:$0xff]
    %v51 = vld [vmem:[%s2 + $0x30] sm:$0xff]
    %v52 = vld [vmem:[%s2 + $0x38] sm:$0xff]
    %v53 = vld [vmem:[%s2 + $0x40] sm:$0xff]
    %v54 = vld [vmem:[%s2 + $0x48] sm:$0xff]
    %v55 = vld [vmem:[%s2 + $0x50] sm:$0xff]
    %v56 = vld [vmem:[%s2 + $0x58] sm:$0xff]
    %v57 = vld [vmem:[%s2 + $0x60] sm:$0xff]
    %v58 = vld [vmem:[%s2 + $0x68] sm:$0xff]
    %v59 = vld [vmem:[%s2 + $0x70] sm:$0xff]
    %v60 = vld [vmem:[%s2 + $0x78] sm:$0xff]
    %v61 = vld [vmem:[%s2 + $0x80] sm:$0xff]
    %v62 = vld [vmem:[%s2 + $0x88] sm:$0xff]
    %v63 = vld [vmem:[%s2 + $0x90] sm:$0xff]
    %v64 = vld [vmem:[%s2 + $0x98] sm:$0xff]
    %v65 = vld [vmem:[%s2 + $0xa0] sm:$0xff]
    %v66 = vld [vmem:[%s2 + $0xa8] sm:$0xff]
    %v67 = vld [vmem:[%s2 + $0xb0] sm:$0xff]
    %v68 = vld [vmem:[%s2 + $0xb8] sm:$0xff]
    %v69 = vld [vmem:[%s2 + $0xc0] sm:$0xff]
    %v70 = vld [vmem:[%s2 + $0xc8] sm:$0xff]
    %v71 = vld [vmem:[%s2 + $0xd0] sm:$0xff]
    %v72 = vld [vmem:[%s2 + $0xd8] sm:$0xff]
    %v73 = vld [vmem:[%s2 + $0xe0] sm:$0xff]
    %v74 = vld [vmem:[%s2 + $0xe8] sm:$0xff]
    %v75 = vld [vmem:[%s2 + $0xf0] sm:$0xff]
    %v76 = vld [vmem:[%s2 + $0xf8] sm:$0xff]
    %v77 = vld [vmem:[%s2 + $0x100] sm:$0xff]
    %v78 = vld [vmem:[%s2 + $0x108] sm:$0xff]
    %v79 = vld [vmem:[%s2 + $0x110] sm:$0xff]
    %v80 = vld [vmem:[%s2 + $0x118] sm:$0xff]
    %v81 = vld [vmem:[%s2 + $0x120] sm:$0xff]
    %v82 = vld [vmem:[%s2 + $0x128] sm:$0xff]
    %v83 = vld [vmem:[%s2 + $0x130] sm:$0xff]
    %v84 = vld [vmem:[%s2 + $0x138] sm:$0xff]
    %v85 = vld [vmem:[%s2 + $0x140] sm:$0xff]
    %v86 = vld [vmem:[%s2 + $0x148] sm:$0xff]
    %v87 = vld [vmem:[%s2 + $0x150] sm:$0xff]
    %v88 = vld [vmem:[%s2 + $0x158] sm:$0xff]
    %v89 = vld [vmem:[%s2 + $0x160] sm:$0xff]
    %v90 = vld [vmem:[%s2 + $0x168] sm:$0xff]
    %v91 = vld [vmem:[%s2 + $0x170] sm:$0xff]
    %v92 = vld [vmem:[%s2 + $0x178] sm:$0xff]
    %v93 = vld [vmem:[%s2 + $0x180] sm:$0xff]
    %v94 = vld [vmem:[%s2 + $0x188] sm:$0xff]
    %v95 = vld [vmem:[%s2 + $0x190] sm:$0xff]
    %v96 = vld [vmem:[%s2 + $0x198] sm:$0xff]
    %v97 = vld [vmem:[%s2 + $0x1a0] sm:$0xff]
    %v98 = vld [vmem:[%s2 + $0x1a8] sm:$0xff]
    %v99 = vld [vmem:[%s2 + $0x1b0] sm:$0xff]
    %v100 = vld [vmem:[%s2 + $0x1b8] sm:$0xff]
    %v101 = vld [vmem:[%s2 + $0x1c0] sm:$0xff]
    %v102 = vld [vmem:[%s2 + $0x1c8] sm:$0xff]
    %v103 = vld [vmem:[%s2 + $0x1d0] sm:$0xff]
    %v104 = vld [vmem:[%s2 + $0x1d8] sm:$0xff]
    %v105 = vld [vmem:[%s2 + $0x1e0] sm:$0xff]
    %v106 = vld [vmem:[%s2 + $0x1e8] sm:$0xff]
    %v107 = vld [vmem:[%s2 + $0x1f0] sm:$0xff]
    %v108 = vld [vmem:[%s2 + $0x1f8] sm:$0xff]
    %v109 = vld [vmem:[%s2 + $0x200] sm:$0xff]
    %v110 = vld [vmem:[%s2 + $0x208] sm:$0xff]
    %v111 = vld [vmem:[%s2 + $0x210] sm:$0xff]
    %v112 = vld [vmem:[%s2 + $0x218] sm:$0xff]
    %v113 = vld [vmem:[%s2 + $0x220] sm:$0xff]
    %v114 = vld [vmem:[%s2 + $0x228] sm:$0xff]
    %v115 = vld [vmem:[%s2 + $0x230] sm:$0xff]
    %v116 = vld [vmem:[%s2 + $0x238] sm:$0xff]
    %v117 = vld [vmem:[%s2 + $0x240] sm:$0xff]
    %v118 = vld [vmem:[%s2 + $0x248] sm:$0xff]
    %v119 = vld [vmem:[%s2 + $0x250] sm:$0xff]
    %v120 = vld [vmem:[%s2 + $0x258] sm:$0xff]
    %v121 = vld [vmem:[%s2 + $0x260] sm:$0xff]
    %v122 = vld [vmem:[%s2 + $0x268] sm:$0xff]
    %v123 = vld [vmem:[%s2 + $0x270] sm:$0xff]
    %v124 = vld [vmem:[%s2 + $0x278] sm:$0xff]
    %v125 = vld [vmem:[%s2 + $0x280] sm:$0xff]
    %v126 = vld [vmem:[%s2 + $0x288] sm:$0xff]
    %v127 = vld [vmem:[%s2 + $0x290] sm:$0xff]
    %v128 = vld [vmem:[%s2 + $0x298] sm:$0xff]
    %v129 = vld [vmem:[%s2 + $0x2a0] sm:$0xff]
    %v130 = vld [vmem:[%s2 + $0x2a8] sm:$0xff]
    %v131 = vld [vmem:[%s2 + $0x2b0] sm:$0xff]
    %v132 = vld [vmem:[%s2 + $0x2b8] sm:$0xff]
    %v133 = vld [vmem:[%s2 + $0x2c0] sm:$0xff]
    %v134 = vld [vmem:[%s2 + $0x2c8] sm:$0xff]
    %v135 = vld [vmem:[%s2 + $0x2d0] sm:$0xff]
    %v136 = vld [vmem:[%s2 + $0x2d8] sm:$0xff]
    %v137 = vld [vmem:[%s2 + $0x2e0] sm:$0xff]
    %v138 = vld [vmem:[%s2 + $0x2e8] sm:$0xff]
    %v139 = vld [vmem:[%s2 + $0x2f0] sm:$0xff]
    %v140 = vld [vmem:[%s2 + $0x2f8] sm:$0xff]
    %v141 = vld [vmem:[%s2 + $0x300] sm:$0xff]
    %v142 = vld [vmem:[%s2 + $0x308] sm:$0xff]
    %v143 = vld [vmem:[%s2 + $0x310] sm:$0xff]
    %v144 = vld [vmem:[%s2 + $0x318] sm:$0xff]
    %v145 = vld [vmem:[%s2 + $0x320] sm:$0xff]
    %v146 = vld [vmem:[%s2 + $0x328] sm:$0xff]
    %v147 = vld [vmem:[%s2 + $0x330] sm:$0xff]
    %v148 = vld [vmem:[%s2 + $0x338] sm:$0xff]
    %v149 = vld [vmem:[%s2 + $0x340] sm:$0xff]
    %v150 = vld [vmem:[%s2 + $0x348] sm:$0xff]
    %v151 = vld [vmem:[%s2 + $0x350] sm:$0xff]
    %v152 = vld [vmem:[%s2 + $0x358] sm:$0xff]
    %v153 = vld [vmem:[%s2 + $0x360] sm:$0xff]
    %v154 = vld [vmem:[%s2 + $0x368] sm:$0xff]
    %v155 = vld [vmem:[%s2 + $0x370] sm:$0xff]
    %v156 = vld [vmem:[%s2 + $0x378] sm:$0xff]
    %v157 = vld [vmem:[%s2 + $0x380] sm:$0xff]
    %v158 = vld [vmem:[%s2 + $0x388] sm:$0xff]
    %v159 = vld [vmem:[%s2 + $0x390] sm:$0xff]
    %v160 = vld [vmem:[%s2 + $0x398] sm:$0xff]
    %v161 = vld [vmem:[%s2 + $0x3a0] sm:$0xff]
    %v162 = vld [vmem:[%s2 + $0x3a8] sm:$0xff]
    %v163 = vld [vmem:[%s2 + $0x3b0] sm:$0xff]
    %v164 = vld [vmem:[%s2 + $0x3b8] sm:$0xff]
    %v165 = vld [vmem:[%s2 + $0x3c0] sm:$0xff]
    %v166 = vld [vmem:[%s2 + $0x3c8] sm:$0xff]
    %v167 = vld [vmem:[%s2 + $0x3d0] sm:$0xff]
    %v168 = vld [vmem:[%s2 + $0x3d8] sm:$0xff]
    %v169 = vld [vmem:[%s2 + $0x3e0] sm:$0xff]
    %v170 = vld [vmem:[%s2 + $0x3e8] sm:$0xff]
    %v171 = vld [vmem:[%s2 + $0x3f0] sm:$0xff]
    %v172 = vld [vmem:[%s2 + $0x3f8] sm:$0xff]
    %v173 = vld [vmem:[%s2 + $0x400] sm:$0xff]
    %v174 = vld [vmem:[%s2 + $0x408] sm:$0xff]
    %v175 = vld [vmem:[%s2 + $0x410] sm:$0xff]
    %v176 = vld [vmem:[%s2 + $0x418] sm:$0xff]
    %v177 = vld [vmem:[%s2 + $0x420] sm:$0xff]
    %v178 = vld [vmem:[%s2 + $0x428] sm:$0xff]
    %v179 = vld [vmem:[%s2 + $0x430] sm:$0xff]
    %v180 = vld [vmem:[%s2 + $0x438] sm:$0xff]
    %v181 = vld [vmem:[%s2 + $0x440] sm:$0xff]
    %v182 = vld [vmem:[%s2 + $0x448] sm:$0xff]
    %v183 = vld [vmem:[%s2 + $0x450] sm:$0xff]
    %v184 = vld [vmem:[%s2 + $0x458] sm:$0xff]
    %v185 = vld [vmem:[%s2 + $0x460] sm:$0xff]
    %v186 = vld [vmem:[%s2 + $0x468] sm:$0xff]
    %v187 = vld [vmem:[%s2 + $0x470] sm:$0xff]
    %v188 = vld [vmem:[%s2 + $0x478] sm:$0xff]
    %v189 = vld [vmem:[%s2 + $0x480] sm:$0xff]
    %v190 = vld [vmem:[%s2 + $0x488] sm:$0xff]
    %v191 = vld [vmem:[%s2 + $0x490] sm:$0xff]
    %v192 = vld [vmem:[%s2 + $0x498] sm:$0xff]
    %v193 = vld [vmem:[%s2 + $0x4a0] sm:$0xff]
    %v194 = vld [vmem:[%s2 + $0x4a8] sm:$0xff]
    %v195 = vld [vmem:[%s2 + $0x4b0] sm:$0xff]
    %v196 = vld [vmem:[%s2 + $0x4b8] sm:$0xff]
    %v197 = vld [vmem:[%s2 + $0x4c0] sm:$0xff]
    %v198 = vld [vmem:[%s2 + $0x4c8] sm:$0xff]
    %v199 = vld [vmem:[%s2 + $0x4d0] sm:$0xff]
    %v200 = vld [vmem:[%s2 + $0x4d8] sm:$0xff]
    %v201 = vld [vmem:[%s2 + $0x4e0] sm:$0xff]
    %v202 = vld [vmem:[%s2 + $0x4e8] sm:$0xff]
    %v203 = vld [vmem:[%s2 + $0x4f0] sm:$0xff]
    %v204 = vld [vmem:[%s2 + $0x4f8] sm:$0xff]
    %v205 = vld [vmem:[%s2 + $0x500] sm:$0xff]
    %v206 = vld [vmem:[%s2 + $0x508] sm:$0xff]
    %v207 = vld [vmem:[%s2 + $0x510] sm:$0xff]
    %v208 = vld [vmem:[%s2 + $0x518] sm:$0xff]
    %v209 = vld [vmem:[%s2 + $0x520] sm:$0xff]
    %v210 = vld [vmem:[%s2 + $0x528] sm:$0xff]
    %v211 = vld [vmem:[%s2 + $0x530] sm:$0xff]
    %v212 = vld [vmem:[%s2 + $0x538] sm:$0xff]
    %v213 = vld [vmem:[%s2 + $0x540] sm:$0xff]
    %v214 = vld [vmem:[%s2 + $0x548] sm:$0xff]
    %v215 = vld [vmem:[%s2 + $0x550] sm:$0xff]
    %v216 = vld [vmem:[%s2 + $0x558] sm:$0xff]
    %v217 = vld [vmem:[%s2 + $0x560] sm:$0xff]
    %v218 = vld [vmem:[%s2 + $0x568] sm:$0xff]
    %v219 = vld [vmem:[%s2 + $0x570] sm:$0xff]
    %v220 = vld [vmem:[%s2 + $0x578] sm:$0xff]
    %v221 = vld [vmem:[%s2 + $0x580] sm:$0xff]
    %v222 = vld [vmem:[%s2 + $0x588] sm:$0xff]
    %v223 = vld [vmem:[%s2 + $0x590] sm:$0xff]
    %v224 = vld [vmem:[%s2 + $0x598] sm:$0xff]
    %v225 = vld [vmem:[%s2 + $0x5a0] sm:$0xff]
    %v226 = vld [vmem:[%s2 + $0x5a8] sm:$0xff]
    %v227 = vld [vmem:[%s2 + $0x5b0] sm:$0xff]
    %v228 = vld [vmem:[%s2 + $0x5b8] sm:$0xff]
    %v229 = vld [vmem:[%s2 + $0x5c0] sm:$0xff]
    %v230 = vld [vmem:[%s2 + $0x5c8] sm:$0xff]
    %v231 = vld [vmem:[%s2 + $0x5d0] sm:$0xff]
    %v232 = vld [vmem:[%s2 + $0x5d8] sm:$0xff]
    %v233 = vld [vmem:[%s2 + $0x5e0] sm:$0xff]
    %v234 = vld [vmem:[%s2 + $0x5e8] sm:$0xff]
    %v235 = vld [vmem:[%s2 + $0x5f0] sm:$0xff]
    %v236 = vld [vmem:[%s2 + $0x5f8] sm:$0xff]
    %v237 = vld [vmem:[%s2 + $0x600] sm:$0xff]
    %v238 = vld [vmem:[%s2 + $0x608] sm:$0xff]
    %v239 = vld [vmem:[%s2 + $0x610] sm:$0xff]
    %v240 = vld [vmem:[%s2 + $0x618] sm:$0xff]
    %v241 = vld [vmem:[%s2 + $0x620] sm:$0xff]
    %v242 = vld [vmem:[%s2 + $0x628] sm:$0xff]
    %v243 = vld [vmem:[%s2 + $0x630] sm:$0xff]
    %v244 = vld [vmem:[%s2 + $0x638] sm:$0xff]
    %v245 = vld [vmem:[%s2 + $0x640] sm:$0xff]
    %v246 = vld [vmem:[%s2 + $0x648] sm:$0xff]
    %v247 = vld [vmem:[%s2 + $0x650] sm:$0xff]
    %v248 = vld [vmem:[%s2 + $0x658] sm:$0xff]
    %v249 = vld [vmem:[%s2 + $0x660] sm:$0xff]
    %v250 = vld [vmem:[%s2 + $0x668] sm:$0xff]
    %v251 = vld [vmem:[%s2 + $0x670] sm:$0xff]
    %v252 = vld [vmem:[%s2 + $0x678] sm:$0xff]
    %v253 = vld [vmem:[%s2 + $0x680] sm:$0xff]
    %v254 = vld [vmem:[%s2 + $0x688] sm:$0xff]
    %v255 = vld [vmem:[%s2 + $0x690] sm:$0xff]
    %v256 = vld [vmem:[%s2 + $0x698] sm:$0xff]
    %v257 = vld [vmem:[%s2 + $0x6a0] sm:$0xff]
    %v258 = vld [vmem:[%s2 + $0x6a8] sm:$0xff]
    %v259 = vld [vmem:[%s2 + $0x6b0] sm:$0xff]
    %v260 = vld [vmem:[%s2 + $0x6b8] sm:$0xff]
    %v261 = vld [vmem:[%s2 + $0x6c0] sm:$0xff]
    %v262 = vld [vmem:[%s2 + $0x6c8] sm:$0xff]
    %v263 = vld [vmem:[%s2 + $0x6d0] sm:$0xff]
    %v264 = vld [vmem:[%s2 + $0x6d8] sm:$0xff]
    %v265 = vld [vmem:[%s2 + $0x6e0] sm:$0xff]
    %v266 = vld [vmem:[%s2 + $0x6e8] sm:$0xff]
    %v267 = vld [vmem:[%s2 + $0x6f0] sm:$0xff]
    %v268 = vld [vmem:[%s2 + $0x6f8] sm:$0xff]
    %v269 = vld [vmem:[%s2 + $0x700] sm:$0xff]
    %v270 = vld [vmem:[%s2 + $0x708] sm:$0xff]
    %v271 = vld [vmem:[%s2 + $0x710] sm:$0xff]
    %v272 = vld [vmem:[%s2 + $0x718] sm:$0xff]
    %v273 = vld [vmem:[%s2 + $0x720] sm:$0xff]
    %v274 = vld [vmem:[%s2 + $0x728] sm:$0xff]
    %v275 = vld [vmem:[%s2 + $0x730] sm:$0xff]
    %v276 = vld [vmem:[%s2 + $0x738] sm:$0xff]
    %v277 = vld [vmem:[%s2 + $0x740] sm:$0xff]
    %v278 = vld [vmem:[%s2 + $0x748] sm:$0xff]
    %v279 = vld [vmem:[%s2 + $0x750] sm:$0xff]
    %v280 = vld [vmem:[%s2 + $0x758] sm:$0xff]
    %v281 = vld [vmem:[%s2 + $0x760] sm:$0xff]
    %v282 = vld [vmem:[%s2 + $0x768] sm:$0xff]
    %v283 = vld [vmem:[%s2 + $0x770] sm:$0xff]
    %v284 = vld [vmem:[%s2 + $0x778] sm:$0xff]
    %v285 = vld [vmem:[%s2 + $0x780] sm:$0xff]
    %v286 = vld [vmem:[%s2 + $0x788] sm:$0xff]
    %v287 = vld [vmem:[%s2 + $0x790] sm:$0xff]
    %v288 = vld [vmem:[%s2 + $0x798] sm:$0xff]
    %v289 = vld [vmem:[%s2 + $0x7a0] sm:$0xff]
    %v290 = vld [vmem:[%s2 + $0x7a8] sm:$0xff]
    %v291 = vld [vmem:[%s2 + $0x7b0] sm:$0xff]
    %v292 = vld [vmem:[%s2 + $0x7b8] sm:$0xff]
    %v293 = vld [vmem:[%s2 + $0x7c0] sm:$0xff]
    %v294 = vld [vmem:[%s2 + $0x7c8] sm:$0xff]
    %v295 = vld [vmem:[%s2 + $0x7d0] sm:$0xff]
    %v296 = vld [vmem:[%s2 + $0x7d8] sm:$0xff]
    %v297 = vld [vmem:[%s2 + $0x7e0] sm:$0xff]
    %v298 = vld [vmem:[%s2 + $0x7e8] sm:$0xff]
    %v299 = vld [vmem:[%s2 + $0x7f0] sm:$0xff]
    %v300 = vld [vmem:[%s2 + $0x7f8] sm:$0xff]
    %v301 = vld [vmem:[%s2 + $0x800] sm:$0xff]
    %v302 = vld [vmem:[%s2 + $0x808] sm:$0xff]
    %v303 = vld [vmem:[%s2 + $0x810] sm:$0xff]
    %v304 = vld [vmem:[%s2 + $0x818] sm:$0xff]
    %v305 = vld [vmem:[%s2 + $0x820] sm:$0xff]
    %v306 = vld [vmem:[%s2 + $0x828] sm:$0xff]
    %v307 = vld [vmem:[%s2 + $0x830] sm:$0xff]
    %v308 = vld [vmem:[%s2 + $0x838] sm:$0xff]
    %v309 = vld [vmem:[%s2 + $0x840] sm:$0xff]
    %v310 = vld [vmem:[%s2 + $0x848] sm:$0xff]
    %v311 = vld [vmem:[%s2 + $0x850] sm:$0xff]
    %v312 = vld [vmem:[%s2 + $0x858] sm:$0xff]
    %v313 = vld [vmem:[%s2 + $0x860] sm:$0xff]
    %v314 = vld [vmem:[%s2 + $0x868] sm:$0xff]
    %v315 = vld [vmem:[%s2 + $0x870] sm:$0xff]
    %v316 = vld [vmem:[%s2 + $0x878] sm:$0xff]
    %v317 = vld [vmem:[%s2 + $0x880] sm:$0xff]
    %v318 = vld [vmem:[%s2 + $0x888] sm:$0xff]
    %v319 = vld [vmem:[%s2 + $0x890] sm:$0xff]
    %v320 = vld [vmem:[%s2 + $0x898] sm:$0xff]
    %v321 = vld [vmem:[%s2 + $0x8a0] sm:$0xff]
    %v322 = vld [vmem:[%s2 + $0x8a8] sm:$0xff]
    %v323 = vld [vmem:[%s2 + $0x8b0] sm:$0xff]
    %v324 = vld [vmem:[%s2 + $0x8b8] sm:$0xff]
    %v325 = vld [vmem:[%s2 + $0x8c0] sm:$0xff]
    %v326 = vld [vmem:[%s2 + $0x8c8] sm:$0xff]
    %v327 = vld [vmem:[%s2 + $0x8d0] sm:$0xff]
    %v328 = vld [vmem:[%s2 + $0x8d8] sm:$0xff]
    %v329 = vld [vmem:[%s2 + $0x8e0] sm:$0xff]
    %v330 = vld [vmem:[%s2 + $0x8e8] sm:$0xff]
    %v331 = vld [vmem:[%s2 + $0x8f0] sm:$0xff]
    %v332 = vld [vmem:[%s2 + $0x8f8] sm:$0xff]
    %v333 = vld [vmem:[%s2 + $0x900] sm:$0xff]
    %v334 = vld [vmem:[%s2 + $0x908] sm:$0xff]
    %v335 = vld [vmem:[%s2 + $0x910] sm:$0xff]
    %v336 = vld [vmem:[%s2 + $0x918] sm:$0xff]
    %v337 = vld [vmem:[%s2 + $0x920] sm:$0xff]
    %v338 = vld [vmem:[%s2 + $0x928] sm:$0xff]
    %v339 = vld [vmem:[%s2 + $0x930] sm:$0xff]
    %v340 = vld [vmem:[%s2 + $0x938] sm:$0xff]
    %v341 = vld [vmem:[%s2 + $0x940] sm:$0xff]
    %v342 = vld [vmem:[%s2 + $0x948] sm:$0xff]
    %v343 = vld [vmem:[%s2 + $0x950] sm:$0xff]
    %v344 = vld [vmem:[%s2 + $0x958] sm:$0xff]
    %v345 = vld [vmem:[%s2 + $0x960] sm:$0xff]
    %v346 = vld [vmem:[%s2 + $0x968] sm:$0xff]
    %v347 = vld [vmem:[%s2 + $0x970] sm:$0xff]
    %v348 = vld [vmem:[%s2 + $0x978] sm:$0xff]
    %v349 = vld [vmem:[%s2 + $0x980] sm:$0xff]
    %v350 = vld [vmem:[%s2 + $0x988] sm:$0xff]
    %v351 = vld [vmem:[%s2 + $0x990] sm:$0xff]
    %v352 = vld [vmem:[%s2 + $0x998] sm:$0xff]
    %v353 = vld [vmem:[%s2 + $0x9a0] sm:$0xff]
    %v354 = vld [vmem:[%s2 + $0x9a8] sm:$0xff]
    %v355 = vld [vmem:[%s2 + $0x9b0] sm:$0xff]
    %v356 = vld [vmem:[%s2 + $0x9b8] sm:$0xff]
    %v357 = vld [vmem:[%s2 + $0x9c0] sm:$0xff]
    %v358 = vld [vmem:[%s2 + $0x9c8] sm:$0xff]
    %v359 = vld [vmem:[%s2 + $0x9d0] sm:$0xff]
    %v360 = vld [vmem:[%s2 + $0x9d8] sm:$0xff]
    %v361 = vld [vmem:[%s2 + $0x9e0] sm:$0xff]
    %v362 = vld [vmem:[%s2 + $0x9e8] sm:$0xff]
    %v363 = vld [vmem:[%s2 + $0x9f0] sm:$0xff]
    %v364 = vld [vmem:[%s2 + $0x9f8] sm:$0xff]
    %v365 = vld [vmem:[%s2 + $0xa00] sm:$0xff]
    %v366 = vld [vmem:[%s2 + $0xa08] sm:$0xff]
    %v367 = vld [vmem:[%s2 + $0xa10] sm:$0xff]
    %v368 = vld [vmem:[%s2 + $0xa18] sm:$0xff]
    %v369 = vld [vmem:[%s2 + $0xa20] sm:$0xff]
    %v370 = vld [vmem:[%s2 + $0xa28] sm:$0xff]
    %v371 = vld [vmem:[%s2 + $0xa30] sm:$0xff]
    %v372 = vld [vmem:[%s2 + $0xa38] sm:$0xff]
    %v373 = vld [vmem:[%s2 + $0xa40] sm:$0xff]
    %v374 = vld [vmem:[%s2 + $0xa48] sm:$0xff]
    %v375 = vld [vmem:[%s2 + $0xa50] sm:$0xff]
    %v376 = vld [vmem:[%s2 + $0xa58] sm:$0xff]
    %v377 = vld [vmem:[%s2 + $0xa60] sm:$0xff]
    %v378 = vld [vmem:[%s2 + $0xa68] sm:$0xff]
    %v379 = vld [vmem:[%s2 + $0xa70] sm:$0xff]
    %v380 = vld [vmem:[%s2 + $0xa78] sm:$0xff]
    %v381 = vld [vmem:[%s2 + $0xa80] sm:$0xff]
    %v382 = vld [vmem:[%s2 + $0xa88] sm:$0xff]
    %v383 = vld [vmem:[%s2 + $0xa90] sm:$0xff]
    %v384 = vld [vmem:[%s2 + $0xa98] sm:$0xff]
    %v385 = vld [vmem:[%s2 + $0xaa0] sm:$0xff]
    %v386 = vld [vmem:[%s2 + $0xaa8] sm:$0xff]
    %v387 = vld [vmem:[%s2 + $0xab0] sm:$0xff]
    %v388 = vld [vmem:[%s2 + $0xab8] sm:$0xff]
    %v389 = vld [vmem:[%s2 + $0xac0] sm:$0xff]
    %v390 = vld [vmem:[%s2 + $0xac8] sm:$0xff]
    %v391 = vld [vmem:[%s2 + $0xad0] sm:$0xff]
    %v392 = vld [vmem:[%s2 + $0xad8] sm:$0xff]
    %v393 = vld [vmem:[%s2 + $0xae0] sm:$0xff]
    %v394 = vld [vmem:[%s2 + $0xae8] sm:$0xff]
    %v395 = vld [vmem:[%s2 + $0xaf0] sm:$0xff]
    %v396 = vld [vmem:[%s2 + $0xaf8] sm:$0xff]
    %v397 = vld [vmem:[%s2 + $0xb00] sm:$0xff]
    %v398 = vld [vmem:[%s2 + $0xb08] sm:$0xff]
    %v399 = vld [vmem:[%s2 + $0xb10] sm:$0xff]
    %v400 = vld [vmem:[%s2 + $0xb18] sm:$0xff]
    %v401 = vld [vmem:[%s2 + $0xb20] sm:$0xff]
    %v402 = vld [vmem:[%s2 + $0xb28] sm:$0xff]
    %v403 = vld [vmem:[%s2 + $0xb30] sm:$0xff]
    %v404 = vld [vmem:[%s2 + $0xb38] sm:$0xff]
    %v405 = vld [vmem:[%s2 + $0xb40] sm:$0xff]
    %v406 = vld [vmem:[%s2 + $0xb48] sm:$0xff]
    %v407 = vld [vmem:[%s2 + $0xb50] sm:$0xff]
    %v408 = vld [vmem:[%s2 + $0xb58] sm:$0xff]
    %v409 = vld [vmem:[%s2 + $0xb60] sm:$0xff]
    %v410 = vld [vmem:[%s2 + $0xb68] sm:$0xff]
    %v411 = vld [vmem:[%s2 + $0xb70] sm:$0xff]
    %v412 = vld [vmem:[%s2 + $0xb78] sm:$0xff]
    %v413 = vld [vmem:[%s2 + $0xb80] sm:$0xff]
    %v414 = vld [vmem:[%s2 + $0xb88] sm:$0xff]
    %v415 = vld [vmem:[%s2 + $0xb90] sm:$0xff]
    %v416 = vld [vmem:[%s2 + $0xb98] sm:$0xff]
    %v417 = vld [vmem:[%s2 + $0xba0] sm:$0xff]
    %v418 = vld [vmem:[%s2 + $0xba8] sm:$0xff]
    %v419 = vld [vmem:[%s2 + $0xbb0] sm:$0xff]
    %v420 = vld [vmem:[%s2 + $0xbb8] sm:$0xff]
    %v421 = vld [vmem:[%s2 + $0xbc0] sm:$0xff]
    %v422 = vld [vmem:[%s2 + $0xbc8] sm:$0xff]
    %v423 = vld [vmem:[%s2 + $0xbd0] sm:$0xff]
    %v424 = vld [vmem:[%s2 + $0xbd8] sm:$0xff]
    %v425 = vld [vmem:[%s2 + $0xbe0] sm:$0xff]
    %v426 = vld [vmem:[%s2 + $0xbe8] sm:$0xff]
    %v427 = vld [vmem:[%s2 + $0xbf0] sm:$0xff]
    %v428 = vld [vmem:[%s2 + $0xbf8] sm:$0xff]
    %v429 = vld [vmem:[%s2 + $0xc00] sm:$0xff]
    %v430 = vld [vmem:[%s2 + $0xc08] sm:$0xff]
    %v431 = vld [vmem:[%s2 + $0xc10] sm:$0xff]
    %v432 = vld [vmem:[%s2 + $0xc18] sm:$0xff]
    %v433 = vld [vmem:[%s2 + $0xc20] sm:$0xff]
    %v434 = vld [vmem:[%s2 + $0xc28] sm:$0xff]
    %v435 = vld [vmem:[%s2 + $0xc30] sm:$0xff]
    %v436 = vld [vmem:[%s2 + $0xc38] sm:$0xff]
    %v437 = vld [vmem:[%s3] sm:$0xf]
    %v439 = vlaneseq
    %v440 = vshrl.u32 %v439, 7
    %v441 = vsub.s32 0, %v440
    %v442 = vrot.slane %v437, %v441
    %v443 = vlaneseq
    %v444 = vshrl.u32 %v443, 7
    %v445 = vsub.s32 1, %v444
    %v446 = vrot.slane %v437, %v445
    %v447 = vlaneseq
    %v448 = vshrl.u32 %v447, 7
    %v449 = vsub.s32 2, %v448
    %v450 = vrot.slane %v437, %v449
    %v451 = vlaneseq
    %v452 = vshrl.u32 %v451, 7
    %v453 = vsub.s32 3, %v452
    %v454 = vrot.slane %v437, %v453
    %vm459 = vcmask 130048
    %v461 = vsel %vm459, %v44, 0
    %463 = vmatprep.subr.mxu0 %v46
    %464 = vmatpush1.msra.mxu0 %v45
    %465 = vmatprep.subr.mxu0 %v50
    %466 = vmatpush1.msra.mxu0 %v49
    %467 = vmatprep.subr.mxu0 %v54
    %468 = vmatpush1.msra.mxu0 %v53
    %469 = vmatprep.subr.mxu0 %v58
    %470 = vmatpush1.msra.mxu0 %v57
    %471 = vmatprep.subr.mxu0 %v62
    %472 = vmatpush1.msra.mxu0 %v61
    %473 = vmatprep.subr.mxu0 %v66
    %474 = vmatpush1.msra.mxu0 %v65
    %475 = vmatprep.subr.mxu0 %v70
    %476 = vmatpush1.msra.mxu0 %v69
    %477 = vmatprep.subr.mxu0 %v74
    %478 = vmatpush1.msra.mxu0 %v73
    %479 = vmatprep.subr.mxu0 %v78
    %480 = vmatpush1.msra.mxu0 %v77
    %481 = vmatprep.subr.mxu0 %v82
    %482 = vmatpush1.msra.mxu0 %v81
    %483 = vmatprep.subr.mxu0 %v86
    %484 = vmatpush1.msra.mxu0 %v85
    %485 = vmatprep.subr.mxu0 %v90
    %486 = vmatpush1.msra.mxu0 %v89
    %487 = vmatprep.subr.mxu0 %v94
    %488 = vmatpush1.msra.mxu0 %v93
    %489 = vmatprep.subr.mxu0 %v98
    %490 = vmatpush1.msra.mxu0 %v97
    %491 = vmatprep.subr.mxu0 %v102
    %492 = vmatpush1.msra.mxu0 %v101
    %493 = vmatprep.subr.mxu0 %v106
    %494 = vmatpush1.msra.mxu0 %v105
    %495 = vmatprep.subr.mxu0 %v110
    %496 = vmatpush1.msra.mxu0 %v109
    %497 = vmatprep.subr.mxu0 %v114
    %498 = vmatpush1.msra.mxu0 %v113
    %499 = vmatprep.subr.mxu0 %v118
    %500 = vmatpush1.msra.mxu0 %v117
    %501 = vmatprep.subr.mxu0 %v122
    %502 = vmatpush1.msra.mxu0 %v121
    %503 = vmatprep.subr.mxu0 %v126
    %504 = vmatpush1.msra.mxu0 %v125
    %505 = vmatprep.subr.mxu0 %v130
    %506 = vmatpush1.msra.mxu0 %v129
    %507 = vmatprep.subr.mxu0 %v134
    %508 = vmatpush1.msra.mxu0 %v133
    %509 = vmatprep.subr.mxu0 %v138
    %510 = vmatpush1.msra.mxu0 %v137
    %511 = vmatprep.subr.mxu0 %v142
    %512 = vmatpush1.msra.mxu0 %v141
    %513 = vmatprep.subr.mxu0 %v146
    %514 = vmatpush1.msra.mxu0 %v145
    %515 = vmatprep.subr.mxu0 %v150
    %516 = vmatpush1.msra.mxu0 %v149
    %517 = vmatprep.subr.mxu0 %v154
    %518 = vmatpush1.msra.mxu0 %v153
    %519 = vmatprep.subr.mxu0 %v158
    %520 = vmatpush1.msra.mxu0 %v157
    %521 = vmatprep.subr.mxu0 %v162
    %522 = vmatpush1.msra.mxu0 %v161
    %523 = vmatprep.subr.mxu0 %v166
    %524 = vmatpush1.msra.mxu0 %v165
    %525 = vmatprep.subr.mxu0 %v170
    %526 = vmatpush1.msra.mxu0 %v169
    %527 = vmatprep.mubr.f32.mxu0 %v39
    %528 = vmatmul.mubr.f32.gmra.mrb[0].mxu0 %v38
    %v529 = vpop.f32.mrb[0].mxu0
    %v530 = vadd.f32 %v442, %v529
    %v531 = vpop.f32.mrb[0].mxu0
    %v532 = vadd.f32 %v446, %v531
    %533 = vdwg.mxu0
    %534 = vmatprep.subr.mxu0 %v174
    %535 = vmatpush1.msra.mxu0 %v173
    %536 = vmatprep.subr.mxu0 %v178
    %537 = vmatpush1.msra.mxu0 %v177
    %538 = vmatprep.subr.mxu0 %v182
    %539 = vmatpush1.msra.mxu0 %v181
    %540 = vmatprep.subr.mxu0 %v186
    %541 = vmatpush1.msra.mxu0 %v185
    %542 = vmatprep.subr.mxu0 %v190
    %543 = vmatpush1.msra.mxu0 %v189
    %544 = vmatprep.subr.mxu0 %v194
    %545 = vmatpush1.msra.mxu0 %v193
    %546 = vmatprep.subr.mxu0 %v198
    %547 = vmatpush1.msra.mxu0 %v197
    %548 = vmatprep.subr.mxu0 %v202
    %549 = vmatpush1.msra.mxu0 %v201
    %550 = vmatprep.subr.mxu0 %v206
    %551 = vmatpush1.msra.mxu0 %v205
    %552 = vmatprep.subr.mxu0 %v210
    %553 = vmatpush1.msra.mxu0 %v209
    %554 = vmatprep.subr.mxu0 %v214
    %555 = vmatpush1.msra.mxu0 %v213
    %556 = vmatprep.subr.mxu0 %v218
    %557 = vmatpush1.msra.mxu0 %v217
    %558 = vmatprep.subr.mxu0 %v222
    %559 = vmatpush1.msra.mxu0 %v221
    %560 = vmatprep.subr.mxu0 %v226
    %561 = vmatpush1.msra.mxu0 %v225
    %562 = vmatprep.subr.mxu0 %v230
    %563 = vmatpush1.msra.mxu0 %v229
    %564 = vmatprep.subr.mxu0 %v234
    %565 = vmatpush1.msra.mxu0 %v233
    %566 = vmatprep.subr.mxu0 %v238
    %567 = vmatpush1.msra.mxu0 %v237
    %568 = vmatprep.subr.mxu0 %v242
    %569 = vmatpush1.msra.mxu0 %v241
    %570 = vmatprep.subr.mxu0 %v246
    %571 = vmatpush1.msra.mxu0 %v245
    %572 = vmatprep.subr.mxu0 %v250
    %573 = vmatpush1.msra.mxu0 %v249
    %574 = vmatprep.subr.mxu0 %v254
    %575 = vmatpush1.msra.mxu0 %v253
    %576 = vmatprep.subr.mxu0 %v258
    %577 = vmatpush1.msra.mxu0 %v257
    %578 = vmatprep.subr.mxu0 %v262
    %579 = vmatpush1.msra.mxu0 %v261
    %580 = vmatprep.subr.mxu0 %v266
    %581 = vmatpush1.msra.mxu0 %v265
    %582 = vmatprep.subr.mxu0 %v270
    %583 = vmatpush1.msra.mxu0 %v269
    %584 = vmatprep.subr.mxu0 %v274
    %585 = vmatpush1.msra.mxu0 %v273
    %586 = vmatprep.subr.mxu0 %v278
    %587 = vmatpush1.msra.mxu0 %v277
    %588 = vmatprep.subr.mxu0 %v282
    %589 = vmatpush1.msra.mxu0 %v281
    %590 = vmatprep.subr.mxu0 %v286
    %591 = vmatpush1.msra.mxu0 %v285
    %592 = vmatprep.subr.mxu0 %v290
    %593 = vmatpush1.msra.mxu0 %v289
    %594 = vmatprep.subr.mxu0 %v294
    %595 = vmatpush1.msra.mxu0 %v293
    %596 = vmatprep.subr.mxu0 %v298
    %597 = vmatpush1.msra.mxu0 %v297
    %598 = vmatprep.mubr.f32.mxu0 %v41
    %599 = vmatmul.mubr.f32.gmra.mrb[0].mxu0 %v40
    %v600 = vpop.f32.mrb[0].mxu0
    %v601 = vadd.f32 %v530, %v600
    %v602 = vpop.f32.mrb[0].mxu0
    %v603 = vadd.f32 %v532, %v602
    %604 = vdwg.mxu0
    %605 = vmatprep.subr.mxu0 %v302
    %606 = vmatpush1.msra.mxu0 %v301
    %607 = vmatprep.subr.mxu0 %v306
    %608 = vmatpush1.msra.mxu0 %v305
    %609 = vmatprep.subr.mxu0 %v310
    %610 = vmatpush1.msra.mxu0 %v309
    %611 = vmatprep.subr.mxu0 %v314
    %612 = vmatpush1.msra.mxu0 %v313
    %613 = vmatprep.subr.mxu0 %v318
    %614 = vmatpush1.msra.mxu0 %v317
    %615 = vmatprep.subr.mxu0 %v322
    %616 = vmatpush1.msra.mxu0 %v321
    %617 = vmatprep.subr.mxu0 %v326
    %618 = vmatpush1.msra.mxu0 %v325
    %619 = vmatprep.subr.mxu0 %v330
    %620 = vmatpush1.msra.mxu0 %v329
    %621 = vmatprep.subr.mxu0 %v334
    %622 = vmatpush1.msra.mxu0 %v333
    %623 = vmatprep.subr.mxu0 %v338
    %624 = vmatpush1.msra.mxu0 %v337
    %625 = vmatprep.subr.mxu0 %v342
    %626 = vmatpush1.msra.mxu0 %v341
    %627 = vmatprep.subr.mxu0 %v346
    %628 = vmatpush1.msra.mxu0 %v345
    %629 = vmatprep.subr.mxu0 %v350
    %630 = vmatpush1.msra.mxu0 %v349
    %631 = vmatprep.subr.mxu0 %v354
    %632 = vmatpush1.msra.mxu0 %v353
    %633 = vmatprep.subr.mxu0 %v358
    %634 = vmatpush1.msra.mxu0 %v357
    %635 = vmatprep.subr.mxu0 %v362
    %636 = vmatpush1.msra.mxu0 %v361
    %637 = vmatprep.subr.mxu0 %v366
    %638 = vmatpush1.msra.mxu0 %v365
    %639 = vmatprep.subr.mxu0 %v370
    %640 = vmatpush1.msra.mxu0 %v369
    %641 = vmatprep.subr.mxu0 %v374
    %642 = vmatpush1.msra.mxu0 %v373
    %643 = vmatprep.subr.mxu0 %v378
    %644 = vmatpush1.msra.mxu0 %v377
    %645 = vmatprep.subr.mxu0 %v382
    %646 = vmatpush1.msra.mxu0 %v381
    %647 = vmatprep.subr.mxu0 %v386
    %648 = vmatpush1.msra.mxu0 %v385
    %649 = vmatprep.subr.mxu0 %v390
    %650 = vmatpush1.msra.mxu0 %v389
    %651 = vmatprep.subr.mxu0 %v394
    %652 = vmatpush1.msra.mxu0 %v393
    %653 = vmatprep.subr.mxu0 %v398
    %654 = vmatpush1.msra.mxu0 %v397
    %655 = vmatprep.subr.mxu0 %v402
    %656 = vmatpush1.msra.mxu0 %v401
    %657 = vmatprep.subr.mxu0 %v406
    %658 = vmatpush1.msra.mxu0 %v405
    %659 = vmatprep.subr.mxu0 %v410
    %660 = vmatpush1.msra.mxu0 %v409
    %661 = vmatprep.subr.mxu0 %v414
    %662 = vmatpush1.msra.mxu0 %v413
    %663 = vmatprep.subr.mxu0 %v418
    %664 = vmatpush1.msra.mxu0 %v417
    %665 = vmatprep.subr.mxu0 %v422
    %666 = vmatpush1.msra.mxu0 %v421
    %667 = vmatprep.subr.mxu0 %v426
    %668 = vmatpush1.msra.mxu0 %v425
    %669 = vmatprep.mubr.f32.mxu0 %v43
    %670 = vmatmul.mubr.f32.gmra.mrb[0].mxu0 %v42
    %v671 = vpop.f32.mrb[0].mxu0
    %v672 = vadd.f32 %v601, %v671
    %v673 = vpop.f32.mrb[0].mxu0
    %v674 = vadd.f32 %v603, %v673
    %675 = vdwg.mxu0
    %676 = vmatprep.subr.mxu0 %v430
    %677 = vmatpush1.msra.mxu0 %v429
    %678 = vmatprep.subr.mxu0 %v434
    %679 = vmatpush1.msra.mxu0 %v433
    %680 = vmatprep.subr.mxu0 0.0
    %681 = vmatpush1.msra.mxu0 0.0
    %682 = vmatprep.subr.mxu0 0.0
    %683 = vmatpush1.msra.mxu0 0.0
    %684 = vmatprep.subr.mxu0 0.0
    %685 = vmatpush1.msra.mxu0 0.0
    %686 = vmatprep.subr.mxu0 0.0
    %687 = vmatpush1.msra.mxu0 0.0
    %688 = vmatprep.subr.mxu0 0.0
    %689 = vmatpush1.msra.mxu0 0.0
    %690 = vmatprep.subr.mxu0 0.0
    %691 = vmatpush1.msra.mxu0 0.0
    %692 = vmatprep.subr.mxu0 0.0
    %693 = vmatpush1.msra.mxu0 0.0
    %694 = vmatprep.subr.mxu0 0.0
    %695 = vmatpush1.msra.mxu0 0.0
    %696 = vmatprep.subr.mxu0 0.0
    %697 = vmatpush1.msra.mxu0 0.0
    %698 = vmatprep.subr.mxu0 0.0
    %699 = vmatpush1.msra.mxu0 0.0
    %700 = vmatprep.subr.mxu0 0.0
    %701 = vmatpush1.msra.mxu0 0.0
    %702 = vmatprep.subr.mxu0 0.0
    %703 = vmatpush1.msra.mxu0 0.0
    %704 = vmatprep.subr.mxu0 0.0
    %705 = vmatpush1.msra.mxu0 0.0
    %706 = vmatprep.subr.mxu0 0.0
    %707 = vmatpush1.msra.mxu0 0.0
    %708 = vmatprep.subr.mxu0 0.0
    %709 = vmatpush1.msra.mxu0 0.0
    %710 = vmatprep.subr.mxu0 0.0
    %711 = vmatpush1.msra.mxu0 0.0
    %712 = vmatprep.subr.mxu0 0.0
    %713 = vmatpush1.msra.mxu0 0.0
    %714 = vmatprep.subr.mxu0 0.0
    %715 = vmatpush1.msra.mxu0 0.0
    %716 = vmatprep.subr.mxu0 0.0
    %717 = vmatpush1.msra.mxu0 0.0
    %718 = vmatprep.subr.mxu0 0.0
    %719 = vmatpush1.msra.mxu0 0.0
    %720 = vmatprep.subr.mxu0 0.0
    %721 = vmatpush1.msra.mxu0 0.0
    %722 = vmatprep.subr.mxu0 0.0
    %723 = vmatpush1.msra.mxu0 0.0
    %724 = vmatprep.subr.mxu0 0.0
    %725 = vmatpush1.msra.mxu0 0.0
    %726 = vmatprep.subr.mxu0 0.0
    %727 = vmatpush1.msra.mxu0 0.0
    %728 = vmatprep.subr.mxu0 0.0
    %729 = vmatpush1.msra.mxu0 0.0
    %730 = vmatprep.subr.mxu0 0.0
    %731 = vmatpush1.msra.mxu0 0.0
    %732 = vmatprep.subr.mxu0 0.0
    %733 = vmatpush1.msra.mxu0 0.0
    %734 = vmatprep.subr.mxu0 0.0
    %735 = vmatpush1.msra.mxu0 0.0
    %736 = vmatprep.subr.mxu0 0.0
    %737 = vmatpush1.msra.mxu0 0.0
    %738 = vmatprep.subr.mxu0 0.0
    %739 = vmatpush1.msra.mxu0 0.0
    %740 = vmatprep.mubr.f32.mxu0 0.0
    %741 = vmatmul.mubr.f32.gmra.mrb[0].mxu0 %v461
    %v742 = vpop.f32.mrb[0].mxu0
    %v743 = vadd.f32 %v672, %v742
    %v744 = vpop.f32.mrb[0].mxu0
    %v745 = vadd.f32 %v674, %v744
    %746 = vdwg.mxu0
    %747 = vmatprep.subr.mxu0 %v48
    %748 = vmatpush1.msra.mxu0 %v47
    %749 = vmatprep.subr.mxu0 %v52
    %750 = vmatpush1.msra.mxu0 %v51
    %751 = vmatprep.subr.mxu0 %v56
    %752 = vmatpush1.msra.mxu0 %v55
    %753 = vmatprep.subr.mxu0 %v60
    %754 = vmatpush1.msra.mxu0 %v59
    %755 = vmatprep.subr.mxu0 %v64
    %756 = vmatpush1.msra.mxu0 %v63
    %757 = vmatprep.subr.mxu0 %v68
    %758 = vmatpush1.msra.mxu0 %v67
    %759 = vmatprep.subr.mxu0 %v72
    %760 = vmatpush1.msra.mxu0 %v71
    %761 = vmatprep.subr.mxu0 %v76
    %762 = vmatpush1.msra.mxu0 %v75
    %763 = vmatprep.subr.mxu0 %v80
    %764 = vmatpush1.msra.mxu0 %v79
    %765 = vmatprep.subr.mxu0 %v84
    %766 = vmatpush1.msra.mxu0 %v83
    %767 = vmatprep.subr.mxu0 %v88
    %768 = vmatpush1.msra.mxu0 %v87
    %769 = vmatprep.subr.mxu0 %v92
    %770 = vmatpush1.msra.mxu0 %v91
    %771 = vmatprep.subr.mxu0 %v96
    %772 = vmatpush1.msra.mxu0 %v95
    %773 = vmatprep.subr.mxu0 %v100
    %774 = vmatpush1.msra.mxu0 %v99
    %775 = vmatprep.subr.mxu0 %v104
    %776 = vmatpush1.msra.mxu0 %v103
    %777 = vmatprep.subr.mxu0 %v108
    %778 = vmatpush1.msra.mxu0 %v107
    %779 = vmatprep.subr.mxu0 %v112
    %780 = vmatpush1.msra.mxu0 %v111
    %781 = vmatprep.subr.mxu0 %v116
    %782 = vmatpush1.msra.mxu0 %v115
    %783 = vmatprep.subr.mxu0 %v120
    %784 = vmatpush1.msra.mxu0 %v119
    %785 = vmatprep.subr.mxu0 %v124
    %786 = vmatpush1.msra.mxu0 %v123
    %787 = vmatprep.subr.mxu0 %v128
    %788 = vmatpush1.msra.mxu0 %v127
    %789 = vmatprep.subr.mxu0 %v132
    %790 = vmatpush1.msra.mxu0 %v131
    %791 = vmatprep.subr.mxu0 %v136
    %792 = vmatpush1.msra.mxu0 %v135
    %793 = vmatprep.subr.mxu0 %v140
    %794 = vmatpush1.msra.mxu0 %v139
    %795 = vmatprep.subr.mxu0 %v144
    %796 = vmatpush1.msra.mxu0 %v143
    %797 = vmatprep.subr.mxu0 %v148
    %798 = vmatpush1.msra.mxu0 %v147
    %799 = vmatprep.subr.mxu0 %v152
    %800 = vmatpush1.msra.mxu0 %v151
    %801 = vmatprep.subr.mxu0 %v156
    %802 = vmatpush1.msra.mxu0 %v155
    %803 = vmatprep.subr.mxu0 %v160
    %804 = vmatpush1.msra.mxu0 %v159
    %805 = vmatprep.subr.mxu0 %v164
    %806 = vmatpush1.msra.mxu0 %v163
    %807 = vmatprep.subr.mxu0 %v168
    %808 = vmatpush1.msra.mxu0 %v167
    %809 = vmatprep.subr.mxu0 %v172
    %810 = vmatpush1.msra.mxu0 %v171
    %811 = vmatprep.mubr.f32.mxu0 %v39
    %812 = vmatmul.mubr.f32.gmra.mrb[0].mxu0 %v38
    %v813 = vpop.f32.mrb[0].mxu0
    %v814 = vadd.f32 %v450, %v813
    %v815 = vpop.f32.mrb[0].mxu0
    %v816 = vadd.f32 %v454, %v815
    %817 = vdwg.mxu0
    %818 = vmatprep.subr.mxu0 %v176
    %819 = vmatpush1.msra.mxu0 %v175
    %820 = vmatprep.subr.mxu0 %v180
    %821 = vmatpush1.msra.mxu0 %v179
    %822 = vmatprep.subr.mxu0 %v184
    %823 = vmatpush1.msra.mxu0 %v183
    %824 = vmatprep.subr.mxu0 %v188
    %825 = vmatpush1.msra.mxu0 %v187
    %826 = vmatprep.subr.mxu0 %v192
    %827 = vmatpush1.msra.mxu0 %v191
    %828 = vmatprep.subr.mxu0 %v196
    %829 = vmatpush1.msra.mxu0 %v195
    %830 = vmatprep.subr.mxu0 %v200
    %831 = vmatpush1.msra.mxu0 %v199
    %832 = vmatprep.subr.mxu0 %v204
    %833 = vmatpush1.msra.mxu0 %v203
    %834 = vmatprep.subr.mxu0 %v208
    %835 = vmatpush1.msra.mxu0 %v207
    %836 = vmatprep.subr.mxu0 %v212
    %837 = vmatpush1.msra.mxu0 %v211
    %838 = vmatprep.subr.mxu0 %v216
    %839 = vmatpush1.msra.mxu0 %v215
    %840 = vmatprep.subr.mxu0 %v220
    %841 = vmatpush1.msra.mxu0 %v219
    %842 = vmatprep.subr.mxu0 %v224
    %843 = vmatpush1.msra.mxu0 %v223
    %844 = vmatprep.subr.mxu0 %v228
    %845 = vmatpush1.msra.mxu0 %v227
    %846 = vmatprep.subr.mxu0 %v232
    %847 = vmatpush1.msra.mxu0 %v231
    %848 = vmatprep.subr.mxu0 %v236
    %849 = vmatpush1.msra.mxu0 %v235
    %850 = vmatprep.subr.mxu0 %v240
    %851 = vmatpush1.msra.mxu0 %v239
    %852 = vmatprep.subr.mxu0 %v244
    %853 = vmatpush1.msra.mxu0 %v243
    %854 = vmatprep.subr.mxu0 %v248
    %855 = vmatpush1.msra.mxu0 %v247
    %856 = vmatprep.subr.mxu0 %v252
    %857 = vmatpush1.msra.mxu0 %v251
    %858 = vmatprep.subr.mxu0 %v256
    %859 = vmatpush1.msra.mxu0 %v255
    %860 = vmatprep.subr.mxu0 %v260
    %861 = vmatpush1.msra.mxu0 %v259
    %862 = vmatprep.subr.mxu0 %v264
    %863 = vmatpush1.msra.mxu0 %v263
    %864 = vmatprep.subr.mxu0 %v268
    %865 = vmatpush1.msra.mxu0 %v267
    %866 = vmatprep.subr.mxu0 %v272
    %867 = vmatpush1.msra.mxu0 %v271
    %868 = vmatprep.subr.mxu0 %v276
    %869 = vmatpush1.msra.mxu0 %v275
    %870 = vmatprep.subr.mxu0 %v280
    %871 = vmatpush1.msra.mxu0 %v279
    %872 = vmatprep.subr.mxu0 %v284
    %873 = vmatpush1.msra.mxu0 %v283
    %874 = vmatprep.subr.mxu0 %v288
    %875 = vmatpush1.msra.mxu0 %v287
    %876 = vmatprep.subr.mxu0 %v292
    %877 = vmatpush1.msra.mxu0 %v291
    %878 = vmatprep.subr.mxu0 %v296
    %879 = vmatpush1.msra.mxu0 %v295
    %880 = vmatprep.subr.mxu0 %v300
    %881 = vmatpush1.msra.mxu0 %v299
    %882 = vmatprep.mubr.f32.mxu0 %v41
    %883 = vmatmul.mubr.f32.gmra.mrb[0].mxu0 %v40
    %v884 = vpop.f32.mrb[0].mxu0
    %v885 = vadd.f32 %v814, %v884
    %v886 = vpop.f32.mrb[0].mxu0
    %v887 = vadd.f32 %v816, %v886
    %888 = vdwg.mxu0
    %889 = vmatprep.subr.mxu0 %v304
    %890 = vmatpush1.msra.mxu0 %v303
    %891 = vmatprep.subr.mxu0 %v308
    %892 = vmatpush1.msra.mxu0 %v307
    %893 = vmatprep.subr.mxu0 %v312
    %894 = vmatpush1.msra.mxu0 %v311
    %895 = vmatprep.subr.mxu0 %v316
    %896 = vmatpush1.msra.mxu0 %v315
    %897 = vmatprep.subr.mxu0 %v320
    %898 = vmatpush1.msra.mxu0 %v319
    %899 = vmatprep.subr.mxu0 %v324
    %900 = vmatpush1.msra.mxu0 %v323
    %901 = vmatprep.subr.mxu0 %v328
    %902 = vmatpush1.msra.mxu0 %v327
    %903 = vmatprep.subr.mxu0 %v332
    %904 = vmatpush1.msra.mxu0 %v331
    %905 = vmatprep.subr.mxu0 %v336
    %906 = vmatpush1.msra.mxu0 %v335
    %907 = vmatprep.subr.mxu0 %v340
    %908 = vmatpush1.msra.mxu0 %v339
    %909 = vmatprep.subr.mxu0 %v344
    %910 = vmatpush1.msra.mxu0 %v343
    %911 = vmatprep.subr.mxu0 %v348
    %912 = vmatpush1.msra.mxu0 %v347
    %913 = vmatprep.subr.mxu0 %v352
    %914 = vmatpush1.msra.mxu0 %v351
    %915 = vmatprep.subr.mxu0 %v356
    %916 = vmatpush1.msra.mxu0 %v355
    %917 = vmatprep.subr.mxu0 %v360
    %918 = vmatpush1.msra.mxu0 %v359
    %919 = vmatprep.subr.mxu0 %v364
    %920 = vmatpush1.msra.mxu0 %v363
    %921 = vmatprep.subr.mxu0 %v368
    %922 = vmatpush1.msra.mxu0 %v367
    %923 = vmatprep.subr.mxu0 %v372
    %924 = vmatpush1.msra.mxu0 %v371
    %925 = vmatprep.subr.mxu0 %v376
    %926 = vmatpush1.msra.mxu0 %v375
    %927 = vmatprep.subr.mxu0 %v380
    %928 = vmatpush1.msra.mxu0 %v379
    %929 = vmatprep.subr.mxu0 %v384
    %930 = vmatpush1.msra.mxu0 %v383
    %931 = vmatprep.subr.mxu0 %v388
    %932 = vmatpush1.msra.mxu0 %v387
    %933 = vmatprep.subr.mxu0 %v392
    %934 = vmatpush1.msra.mxu0 %v391
    %935 = vmatprep.subr.mxu0 %v396
    %936 = vmatpush1.msra.mxu0 %v395
    %937 = vmatprep.subr.mxu0 %v400
    %938 = vmatpush1.msra.mxu0 %v399
    %939 = vmatprep.subr.mxu0 %v404
    %940 = vmatpush1.msra.mxu0 %v403
    %941 = vmatprep.subr.mxu0 %v408
    %942 = vmatpush1.msra.mxu0 %v407
    %943 = vmatprep.subr.mxu0 %v412
    %944 = vmatpush1.msra.mxu0 %v411
    %945 = vmatprep.subr.mxu0 %v416
    %946 = vmatpush1.msra.mxu0 %v415
    %947 = vmatprep.subr.mxu0 %v420
    %948 = vmatpush1.msra.mxu0 %v419
    %949 = vmatprep.subr.mxu0 %v424
    %950 = vmatpush1.msra.mxu0 %v423
    %951 = vmatprep.subr.mxu0 %v428
    %952 = vmatpush1.msra.mxu0 %v427
    %953 = vmatprep.mubr.f32.mxu0 %v43
    %954 = vmatmul.mubr.f32.gmra.mrb[0].mxu0 %v42
    %v955 = vpop.f32.mrb[0].mxu0
    %v956 = vadd.f32 %v885, %v955
    %v957 = vpop.f32.mrb[0].mxu0
    %v958 = vadd.f32 %v887, %v957
    %959 = vdwg.mxu0
    %960 = vmatprep.subr.mxu0 %v432
    %961 = vmatpush1.msra.mxu0 %v431
    %962 = vmatprep.subr.mxu0 %v436
    %963 = vmatpush1.msra.mxu0 %v435
    %964 = vmatprep.subr.mxu0 0.0
    %965 = vmatpush1.msra.mxu0 0.0
    %966 = vmatprep.subr.mxu0 0.0
    %967 = vmatpush1.msra.mxu0 0.0
    %968 = vmatprep.subr.mxu0 0.0
    %969 = vmatpush1.msra.mxu0 0.0
    %970 = vmatprep.subr.mxu0 0.0
    %971 = vmatpush1.msra.mxu0 0.0
    %972 = vmatprep.subr.mxu0 0.0
    %973 = vmatpush1.msra.mxu0 0.0
    %974 = vmatprep.subr.mxu0 0.0
    %975 = vmatpush1.msra.mxu0 0.0
    %976 = vmatprep.subr.mxu0 0.0
    %977 = vmatpush1.msra.mxu0 0.0
    %978 = vmatprep.subr.mxu0 0.0
    %979 = vmatpush1.msra.mxu0 0.0
    %980 = vmatprep.subr.mxu0 0.0
    %981 = vmatpush1.msra.mxu0 0.0
    %982 = vmatprep.subr.mxu0 0.0
    %983 = vmatpush1.msra.mxu0 0.0
    %984 = vmatprep.subr.mxu0 0.0
    %985 = vmatpush1.msra.mxu0 0.0
    %986 = vmatprep.subr.mxu0 0.0
    %987 = vmatpush1.msra.mxu0 0.0
    %988 = vmatprep.subr.mxu0 0.0
    %989 = vmatpush1.msra.mxu0 0.0
    %990 = vmatprep.subr.mxu0 0.0
    %991 = vmatpush1.msra.mxu0 0.0
    %992 = vmatprep.subr.mxu0 0.0
    %993 = vmatpush1.msra.mxu0 0.0
    %994 = vmatprep.subr.mxu0 0.0
    %995 = vmatpush1.msra.mxu0 0.0
    %996 = vmatprep.subr.mxu0 0.0
    %997 = vmatpush1.msra.mxu0 0.0
    %998 = vmatprep.subr.mxu0 0.0
    %999 = vmatpush1.msra.mxu0 0.0
    %1000 = vmatprep.subr.mxu0 0.0
    %1001 = vmatpush1.msra.mxu0 0.0
    %1002 = vmatprep.subr.mxu0 0.0
    %1003 = vmatpush1.msra.mxu0 0.0
    %1004 = vmatprep.subr.mxu0 0.0
    %1005 = vmatpush1.msra.mxu0 0.0
    %1006 = vmatprep.subr.mxu0 0.0
    %1007 = vmatpush1.msra.mxu0 0.0
    %1008 = vmatprep.subr.mxu0 0.0
    %1009 = vmatpush1.msra.mxu0 0.0
    %1010 = vmatprep.subr.mxu0 0.0
    %1011 = vmatpush1.msra.mxu0 0.0
    %1012 = vmatprep.subr.mxu0 0.0
    %1013 = vmatpush1.msra.mxu0 0.0
    %1014 = vmatprep.subr.mxu0 0.0
    %1015 = vmatpush1.msra.mxu0 0.0
    %1016 = vmatprep.subr.mxu0 0.0
    %1017 = vmatpush1.msra.mxu0 0.0
    %1018 = vmatprep.subr.mxu0 0.0
    %1019 = vmatpush1.msra.mxu0 0.0
    %1020 = vmatprep.subr.mxu0 0.0
    %1021 = vmatpush1.msra.mxu0 0.0
    %1022 = vmatprep.subr.mxu0 0.0
    %1023 = vmatpush1.msra.mxu0 0.0
    %1024 = vmatprep.mubr.f32.mxu0 0.0
    %1025 = vmatmul.mubr.f32.gmra.mrb[0].mxu0 %v461
    %v1026 = vpop.f32.mrb[0].mxu0
    %v1027 = vadd.f32 %v956, %v1026
    %v1028 = vpop.f32.mrb[0].mxu0
    %v1029 = vadd.f32 %v958, %v1028
    %1030 = vdwg.mxu0
    %v1031 = vmax.f32 %v743, 0.0
    %v1032 = vmax.f32 %v745, 0.0
    %v1033 = vmax.f32 %v1027, 0.0
    %v1034 = vmax.f32 %v1029, 0.0
    %v1035 = vld [vmem:[%s4] sm:$0xff]
    %v1036 = vld [vmem:[%s4 + $0x8] sm:$0xff]
    %v1037 = vld [vmem:[%s4 + $0x10] sm:$0xff]
    %v1038 = vld [vmem:[%s4 + $0x18] sm:$0xff]
    %v1039 = vld [vmem:[%s4 + $0x20] sm:$0xff]
    %v1040 = vld [vmem:[%s4 + $0x28] sm:$0xff]
    %v1041 = vld [vmem:[%s4 + $0x30] sm:$0xff]
    %v1042 = vld [vmem:[%s4 + $0x38] sm:$0xff]
    %v1043 = vld [vmem:[%s4 + $0x40] sm:$0xff]
    %v1044 = vld [vmem:[%s4 + $0x48] sm:$0xff]
    %v1045 = vld [vmem:[%s4 + $0x50] sm:$0xff]
    %v1046 = vld [vmem:[%s4 + $0x58] sm:$0xff]
    %v1047 = vld [vmem:[%s4 + $0x60] sm:$0xff]
    %v1048 = vld [vmem:[%s4 + $0x68] sm:$0xff]
    %v1049 = vld [vmem:[%s4 + $0x70] sm:$0xff]
    %v1050 = vld [vmem:[%s4 + $0x78] sm:$0xff]
    %v1051 = vld [vmem:[%s4 + $0x80] sm:$0xff]
    %v1052 = vld [vmem:[%s4 + $0x88] sm:$0xff]
    %v1053 = vld [vmem:[%s4 + $0x90] sm:$0xff]
    %v1054 = vld [vmem:[%s4 + $0x98] sm:$0xff]
    %v1055 = vld [vmem:[%s4 + $0xa0] sm:$0xff]
    %v1056 = vld [vmem:[%s4 + $0xa8] sm:$0xff]
    %v1057 = vld [vmem:[%s4 + $0xb0] sm:$0xff]
    %v1058 = vld [vmem:[%s4 + $0xb8] sm:$0xff]
    %v1059 = vld [vmem:[%s4 + $0xc0] sm:$0xff]
    %v1060 = vld [vmem:[%s4 + $0xc8] sm:$0xff]
    %v1061 = vld [vmem:[%s4 + $0xd0] sm:$0xff]
    %v1062 = vld [vmem:[%s4 + $0xd8] sm:$0xff]
    %v1063 = vld [vmem:[%s4 + $0xe0] sm:$0xff]
    %v1064 = vld [vmem:[%s4 + $0xe8] sm:$0xff]
    %v1065 = vld [vmem:[%s4 + $0xf0] sm:$0xff]
    %v1066 = vld [vmem:[%s4 + $0xf8] sm:$0xff]
    %v1067 = vld [vmem:[%s4 + $0x100] sm:$0xff]
    %v1068 = vld [vmem:[%s4 + $0x108] sm:$0xff]
    %v1069 = vld [vmem:[%s4 + $0x110] sm:$0xff]
    %v1070 = vld [vmem:[%s4 + $0x118] sm:$0xff]
    %v1071 = vld [vmem:[%s4 + $0x120] sm:$0xff]
    %v1072 = vld [vmem:[%s4 + $0x128] sm:$0xff]
    %v1073 = vld [vmem:[%s4 + $0x130] sm:$0xff]
    %v1074 = vld [vmem:[%s4 + $0x138] sm:$0xff]
    %v1075 = vld [vmem:[%s4 + $0x140] sm:$0xff]
    %v1076 = vld [vmem:[%s4 + $0x148] sm:$0xff]
    %v1077 = vld [vmem:[%s4 + $0x150] sm:$0xff]
    %v1078 = vld [vmem:[%s4 + $0x158] sm:$0xff]
    %v1079 = vld [vmem:[%s4 + $0x160] sm:$0xff]
    %v1080 = vld [vmem:[%s4 + $0x168] sm:$0xff]
    %v1081 = vld [vmem:[%s4 + $0x170] sm:$0xff]
    %v1082 = vld [vmem:[%s4 + $0x178] sm:$0xff]
    %v1083 = vld [vmem:[%s4 + $0x180] sm:$0xff]
    %v1084 = vld [vmem:[%s4 + $0x188] sm:$0xff]
    %v1085 = vld [vmem:[%s5] sm:$0x1]
    %v1087 = vlaneseq
    %v1088 = vshrl.u32 %v1087, 7
    %v1089 = vsub.s32 0, %v1088
    %v1090 = vrot.slane %v1085, %v1089
    %v1093 = vsel %vm459, %v1034, 0
    %1095 = vmatprep.subr.mxu0 0.0
    %1096 = vmatpush1.msra.mxu0 %v1035
    %1097 = vmatprep.subr.mxu0 0.0
    %1098 = vmatpush1.msra.mxu0 %v1036
    %1099 = vmatprep.subr.mxu0 0.0
    %1100 = vmatpush1.msra.mxu0 %v1037
    %1101 = vmatprep.subr.mxu0 0.0
    %1102 = vmatpush1.msra.mxu0 %v1038
    %1103 = vmatprep.subr.mxu0 0.0
    %1104 = vmatpush1.msra.mxu0 %v1039
    %1105 = vmatprep.subr.mxu0 0.0
    %1106 = vmatpush1.msra.mxu0 %v1040
    %1107 = vmatprep.subr.mxu0 0.0
    %1108 = vmatpush1.msra.mxu0 %v1041
    %1109 = vmatprep.subr.mxu0 0.0
    %1110 = vmatpush1.msra.mxu0 %v1042
    %1111 = vmatprep.subr.mxu0 0.0
    %1112 = vmatpush1.msra.mxu0 %v1043
    %1113 = vmatprep.subr.mxu0 0.0
    %1114 = vmatpush1.msra.mxu0 %v1044
    %1115 = vmatprep.subr.mxu0 0.0
    %1116 = vmatpush1.msra.mxu0 %v1045
    %1117 = vmatprep.subr.mxu0 0.0
    %1118 = vmatpush1.msra.mxu0 %v1046
    %1119 = vmatprep.subr.mxu0 0.0
    %1120 = vmatpush1.msra.mxu0 %v1047
    %1121 = vmatprep.subr.mxu0 0.0
    %1122 = vmatpush1.msra.mxu0 %v1048
    %1123 = vmatprep.subr.mxu0 0.0
    %1124 = vmatpush1.msra.mxu0 %v1049
    %1125 = vmatprep.subr.mxu0 0.0
    %1126 = vmatpush1.msra.mxu0 %v1050
    %1127 = vmatprep.subr.mxu0 0.0
    %1128 = vmatpush1.msra.mxu0 %v1051
    %1129 = vmatprep.subr.mxu0 0.0
    %1130 = vmatpush1.msra.mxu0 %v1052
    %1131 = vmatprep.subr.mxu0 0.0
    %1132 = vmatpush1.msra.mxu0 %v1053
    %1133 = vmatprep.subr.mxu0 0.0
    %1134 = vmatpush1.msra.mxu0 %v1054
    %1135 = vmatprep.subr.mxu0 0.0
    %1136 = vmatpush1.msra.mxu0 %v1055
    %1137 = vmatprep.subr.mxu0 0.0
    %1138 = vmatpush1.msra.mxu0 %v1056
    %1139 = vmatprep.subr.mxu0 0.0
    %1140 = vmatpush1.msra.mxu0 %v1057
    %1141 = vmatprep.subr.mxu0 0.0
    %1142 = vmatpush1.msra.mxu0 %v1058
    %1143 = vmatprep.subr.mxu0 0.0
    %1144 = vmatpush1.msra.mxu0 %v1059
    %1145 = vmatprep.subr.mxu0 0.0
    %1146 = vmatpush1.msra.mxu0 %v1060
    %1147 = vmatprep.subr.mxu0 0.0
    %1148 = vmatpush1.msra.mxu0 %v1061
    %1149 = vmatprep.subr.mxu0 0.0
    %1150 = vmatpush1.msra.mxu0 %v1062
    %1151 = vmatprep.subr.mxu0 0.0
    %1152 = vmatpush1.msra.mxu0 %v1063
    %1153 = vmatprep.subr.mxu0 0.0
    %1154 = vmatpush1.msra.mxu0 %v1064
    %1155 = vmatprep.subr.mxu0 0.0
    %1156 = vmatpush1.msra.mxu0 %v1065
    %1157 = vmatprep.subr.mxu0 0.0
    %1158 = vmatpush1.msra.mxu0 %v1066
    %1159 = vmatprep.mubr.f32.mxu0 %v1032
    %1160 = vmatmul.mubr.f32.gmra.mrb[0].mxu0 %v1031
    %v1161 = vpop.f32.mrb[0].mxu0
    %v1162 = vadd.f32 %v1090, %v1161
    %v1163 = vpop.f32.mrb[0].mxu0
    %1164 = vdwg.mxu0
    %1165 = vmatprep.subr.mxu0 0.0
    %1166 = vmatpush1.msra.mxu0 %v1067
    %1167 = vmatprep.subr.mxu0 0.0
    %1168 = vmatpush1.msra.mxu0 %v1068
    %1169 = vmatprep.subr.mxu0 0.0
    %1170 = vmatpush1.msra.mxu0 %v1069
    %1171 = vmatprep.subr.mxu0 0.0
    %1172 = vmatpush1.msra.mxu0 %v1070
    %1173 = vmatprep.subr.mxu0 0.0
    %1174 = vmatpush1.msra.mxu0 %v1071
    %1175 = vmatprep.subr.mxu0 0.0
    %1176 = vmatpush1.msra.mxu0 %v1072
    %1177 = vmatprep.subr.mxu0 0.0
    %1178 = vmatpush1.msra.mxu0 %v1073
    %1179 = vmatprep.subr.mxu0 0.0
    %1180 = vmatpush1.msra.mxu0 %v1074
    %1181 = vmatprep.subr.mxu0 0.0
    %1182 = vmatpush1.msra.mxu0 %v1075
    %1183 = vmatprep.subr.mxu0 0.0
    %1184 = vmatpush1.msra.mxu0 %v1076
    %1185 = vmatprep.subr.mxu0 0.0
    %1186 = vmatpush1.msra.mxu0 %v1077
    %1187 = vmatprep.subr.mxu0 0.0
    %1188 = vmatpush1.msra.mxu0 %v1078
    %1189 = vmatprep.subr.mxu0 0.0
    %1190 = vmatpush1.msra.mxu0 %v1079
    %1191 = vmatprep.subr.mxu0 0.0
    %1192 = vmatpush1.msra.mxu0 %v1080
    %1193 = vmatprep.subr.mxu0 0.0
    %1194 = vmatpush1.msra.mxu0 %v1081
    %1195 = vmatprep.subr.mxu0 0.0
    %1196 = vmatpush1.msra.mxu0 %v1082
    %1197 = vmatprep.subr.mxu0 0.0
    %1198 = vmatpush1.msra.mxu0 %v1083
    %1199 = vmatprep.subr.mxu0 0.0
    %1200 = vmatpush1.msra.mxu0 %v1084
    %1201 = vmatprep.subr.mxu0 0.0
    %1202 = vmatpush1.msra.mxu0 0.0
    %1203 = vmatprep.subr.mxu0 0.0
    %1204 = vmatpush1.msra.mxu0 0.0
    %1205 = vmatprep.subr.mxu0 0.0
    %1206 = vmatpush1.msra.mxu0 0.0
    %1207 = vmatprep.subr.mxu0 0.0
    %1208 = vmatpush1.msra.mxu0 0.0
    %1209 = vmatprep.subr.mxu0 0.0
    %1210 = vmatpush1.msra.mxu0 0.0
    %1211 = vmatprep.subr.mxu0 0.0
    %1212 = vmatpush1.msra.mxu0 0.0
    %1213 = vmatprep.subr.mxu0 0.0
    %1214 = vmatpush1.msra.mxu0 0.0
    %1215 = vmatprep.subr.mxu0 0.0
    %1216 = vmatpush1.msra.mxu0 0.0
    %1217 = vmatprep.subr.mxu0 0.0
    %1218 = vmatpush1.msra.mxu0 0.0
    %1219 = vmatprep.subr.mxu0 0.0
    %1220 = vmatpush1.msra.mxu0 0.0
    %1221 = vmatprep.subr.mxu0 0.0
    %1222 = vmatpush1.msra.mxu0 0.0
    %1223 = vmatprep.subr.mxu0 0.0
    %1224 = vmatpush1.msra.mxu0 0.0
    %1225 = vmatprep.subr.mxu0 0.0
    %1226 = vmatpush1.msra.mxu0 0.0
    %1227 = vmatprep.subr.mxu0 0.0
    %1228 = vmatpush1.msra.mxu0 0.0
    %1229 = vmatprep.mubr.f32.mxu0 %v1093
    %1230 = vmatmul.mubr.f32.gmra.mrb[0].mxu0 %v1033
    %v1231 = vpop.f32.mrb[0].mxu0
    %v1232 = vadd.f32 %v1162, %v1231
    %v1233 = vpop.f32.mrb[0].mxu0
    %1234 = vdwg.mxu0
    %v1235 = vmul.f32 %v1232, 0.5
    %v1236 = vmul.f32 %v1235, 1.442695
    %v1237 = vpow.pop %v1236
    %v1238 = vld [vmem:[%s1] sm:$0xff]
    %1240 = vrot.lane.b32.xlu0 %v1237, 126
    %v1241 = vpop.permute.xlu0 %1240
    %v1243 = vmul.f32 %v1238, %v1241
    %v1244 = vadd.f32 %v1232, %v1243
    %v1245 = vld [vmem:[%s6] ss:$2 sm:$0xf]
    %1247 = vset.pattern.permute.xlu0 0
    %1248 = vperm.xlu0 %1247, %v1244
    %v1249 = vpop.permute.xlu0 %1248
    %v1252 = vlaneseq
    %v1253 = vshrl.u32 %v1252, 7
    %v1254 = vsub.s32 0, %v1253
    %v1255 = vrot.slane %v1245, %v1254
    %v1256 = vlaneseq
    %v1257 = vshrl.u32 %v1256, 7
    %v1258 = vsub.s32 1, %v1257
    %v1259 = vrot.slane %v1245, %v1258
    %v1260 = vlaneseq
    %v1261 = vshrl.u32 %v1260, 7
    %v1262 = vsub.s32 2, %v1261
    %v1263 = vrot.slane %v1245, %v1262
    %v1264 = vlaneseq
    %v1265 = vshrl.u32 %v1264, 7
    %v1266 = vsub.s32 3, %v1265
    %v1267 = vrot.slane %v1245, %v1266
    %v1272 = vmul.f32 %v1249, %v1255
    %v1273 = vmul.f32 %v1249, %v1259
    %v1274 = vmul.f32 %v1249, %v1263
    %v1275 = vmul.f32 %v1249, %v1267
    %s1276 = scalar_lea.vmem %s6, 1
    %v1277 = vld [vmem:[%s1276] ss:$2 sm:$0xf]
    %1278 = vset.pattern.permute.xlu0 1
    %1279 = vperm.xlu0 %1278, %v1244
    %v1280 = vpop.permute.xlu0 %1279
    %v1283 = vlaneseq
    %v1284 = vshrl.u32 %v1283, 7
    %v1285 = vsub.s32 0, %v1284
    %v1286 = vrot.slane %v1277, %v1285
    %v1287 = vlaneseq
    %v1288 = vshrl.u32 %v1287, 7
    %v1289 = vsub.s32 1, %v1288
    %v1290 = vrot.slane %v1277, %v1289
    %v1291 = vlaneseq
    %v1292 = vshrl.u32 %v1291, 7
    %v1293 = vsub.s32 2, %v1292
    %v1294 = vrot.slane %v1277, %v1293
    %v1295 = vlaneseq
    %v1296 = vshrl.u32 %v1295, 7
    %v1297 = vsub.s32 3, %v1296
    %v1298 = vrot.slane %v1277, %v1297
    %v1303 = vmul.f32 %v1280, %v1286
    %v1304 = vmul.f32 %v1280, %v1290
    %v1305 = vmul.f32 %v1280, %v1294
    %v1306 = vmul.f32 %v1280, %v1298
    %v1307 = vadd.f32 %v1272, %v1303
    %v1308 = vadd.f32 %v1273, %v1304
    %v1309 = vadd.f32 %v1274, %v1305
    %v1310 = vadd.f32 %v1275, %v1306
    %v1311 = vld [vmem:[%s7] sm:$0xf]
    %v1313 = vlaneseq
    %v1314 = vshrl.u32 %v1313, 7
    %v1315 = vsub.s32 0, %v1314
    %v1316 = vrot.slane %v1311, %v1315
    %v1317 = vlaneseq
    %v1318 = vshrl.u32 %v1317, 7
    %v1319 = vsub.s32 1, %v1318
    %v1320 = vrot.slane %v1311, %v1319
    %v1321 = vlaneseq
    %v1322 = vshrl.u32 %v1321, 7
    %v1323 = vsub.s32 2, %v1322
    %v1324 = vrot.slane %v1311, %v1323
    %v1325 = vlaneseq
    %v1326 = vshrl.u32 %v1325, 7
    %v1327 = vsub.s32 3, %v1326
    %v1328 = vrot.slane %v1311, %v1327
    %v1333 = vadd.f32 %v1307, %v1316
    %v1334 = vadd.f32 %v1308, %v1320
    %v1335 = vadd.f32 %v1309, %v1324
    %v1336 = vadd.f32 %v1310, %v1328
    %v1337 = vmax.f32 %v1333, 0.0
    %v1338 = vmax.f32 %v1334, 0.0
    %v1339 = vmax.f32 %v1335, 0.0
    %v1340 = vmax.f32 %v1336, 0.0
    %v1341 = vld [vmem:[%s8] sm:$0xff]
    %v1342 = vld [vmem:[%s8 + $0x8] sm:$0xff]
    %v1343 = vld [vmem:[%s8 + $0x10] sm:$0xff]
    %v1344 = vld [vmem:[%s8 + $0x18] sm:$0xff]
    %v1345 = vld [vmem:[%s8 + $0x20] sm:$0xff]
    %v1346 = vld [vmem:[%s8 + $0x28] sm:$0xff]
    %v1347 = vld [vmem:[%s8 + $0x30] sm:$0xff]
    %v1348 = vld [vmem:[%s8 + $0x38] sm:$0xff]
    %v1349 = vld [vmem:[%s8 + $0x40] sm:$0xff]
    %v1350 = vld [vmem:[%s8 + $0x48] sm:$0xff]
    %v1351 = vld [vmem:[%s8 + $0x50] sm:$0xff]
    %v1352 = vld [vmem:[%s8 + $0x58] sm:$0xff]
    %v1353 = vld [vmem:[%s8 + $0x60] sm:$0xff]
    %v1354 = vld [vmem:[%s8 + $0x68] sm:$0xff]
    %v1355 = vld [vmem:[%s8 + $0x70] sm:$0xff]
    %v1356 = vld [vmem:[%s8 + $0x78] sm:$0xff]
    %v1357 = vld [vmem:[%s8 + $0x80] sm:$0xff]
    %v1358 = vld [vmem:[%s8 + $0x88] sm:$0xff]
    %v1359 = vld [vmem:[%s8 + $0x90] sm:$0xff]
    %v1360 = vld [vmem:[%s8 + $0x98] sm:$0xff]
    %v1361 = vld [vmem:[%s8 + $0xa0] sm:$0xff]
    %v1362 = vld [vmem:[%s8 + $0xa8] sm:$0xff]
    %v1363 = vld [vmem:[%s8 + $0xb0] sm:$0xff]
    %v1364 = vld [vmem:[%s8 + $0xb8] sm:$0xff]
    %v1365 = vld [vmem:[%s8 + $0xc0] sm:$0xff]
    %v1366 = vld [vmem:[%s8 + $0xc8] sm:$0xff]
    %v1367 = vld [vmem:[%s8 + $0xd0] sm:$0xff]
    %v1368 = vld [vmem:[%s8 + $0xd8] sm:$0xff]
    %v1369 = vld [vmem:[%s8 + $0xe0] sm:$0xff]
    %v1370 = vld [vmem:[%s8 + $0xe8] sm:$0xff]
    %v1371 = vld [vmem:[%s8 + $0xf0] sm:$0xff]
    %v1372 = vld [vmem:[%s8 + $0xf8] sm:$0xff]
    %v1373 = vld [vmem:[%s8 + $0x100] sm:$0xff]
    %v1374 = vld [vmem:[%s8 + $0x108] sm:$0xff]
    %v1375 = vld [vmem:[%s8 + $0x110] sm:$0xff]
    %v1376 = vld [vmem:[%s8 + $0x118] sm:$0xff]
    %v1377 = vld [vmem:[%s8 + $0x120] sm:$0xff]
    %v1378 = vld [vmem:[%s8 + $0x128] sm:$0xff]
    %v1379 = vld [vmem:[%s8 + $0x130] sm:$0xff]
    %v1380 = vld [vmem:[%s8 + $0x138] sm:$0xff]
    %v1381 = vld [vmem:[%s8 + $0x140] sm:$0xff]
    %v1382 = vld [vmem:[%s8 + $0x148] sm:$0xff]
    %v1383 = vld [vmem:[%s8 + $0x150] sm:$0xff]
    %v1384 = vld [vmem:[%s8 + $0x158] sm:$0xff]
    %v1385 = vld [vmem:[%s8 + $0x160] sm:$0xff]
    %v1386 = vld [vmem:[%s8 + $0x168] sm:$0xff]
    %v1387 = vld [vmem:[%s8 + $0x170] sm:$0xff]
    %v1388 = vld [vmem:[%s8 + $0x178] sm:$0xff]
    %v1389 = vld [vmem:[%s8 + $0x180] sm:$0xff]
    %v1390 = vld [vmem:[%s8 + $0x188] sm:$0xff]
    %v1391 = vld [vmem:[%s8 + $0x190] sm:$0xff]
    %v1392 = vld [vmem:[%s8 + $0x198] sm:$0xff]
    %v1393 = vld [vmem:[%s8 + $0x1a0] sm:$0xff]
    %v1394 = vld [vmem:[%s8 + $0x1a8] sm:$0xff]
    %v1395 = vld [vmem:[%s8 + $0x1b0] sm:$0xff]
    %v1396 = vld [vmem:[%s8 + $0x1b8] sm:$0xff]
    %v1397 = vld [vmem:[%s8 + $0x1c0] sm:$0xff]
    %v1398 = vld [vmem:[%s8 + $0x1c8] sm:$0xff]
    %v1399 = vld [vmem:[%s8 + $0x1d0] sm:$0xff]
    %v1400 = vld [vmem:[%s8 + $0x1d8] sm:$0xff]
    %v1401 = vld [vmem:[%s8 + $0x1e0] sm:$0xff]
    %v1402 = vld [vmem:[%s8 + $0x1e8] sm:$0xff]
    %v1403 = vld [vmem:[%s8 + $0x1f0] sm:$0xff]
    %v1404 = vld [vmem:[%s8 + $0x1f8] sm:$0xff]
    %v1405 = vld [vmem:[%s8 + $0x200] sm:$0xff]
    %v1406 = vld [vmem:[%s8 + $0x208] sm:$0xff]
    %v1407 = vld [vmem:[%s8 + $0x210] sm:$0xff]
    %v1408 = vld [vmem:[%s8 + $0x218] sm:$0xff]
    %v1409 = vld [vmem:[%s8 + $0x220] sm:$0xff]
    %v1410 = vld [vmem:[%s8 + $0x228] sm:$0xff]
    %v1411 = vld [vmem:[%s8 + $0x230] sm:$0xff]
    %v1412 = vld [vmem:[%s8 + $0x238] sm:$0xff]
    %v1413 = vld [vmem:[%s8 + $0x240] sm:$0xff]
    %v1414 = vld [vmem:[%s8 + $0x248] sm:$0xff]
    %v1415 = vld [vmem:[%s8 + $0x250] sm:$0xff]
    %v1416 = vld [vmem:[%s8 + $0x258] sm:$0xff]
    %v1417 = vld [vmem:[%s8 + $0x260] sm:$0xff]
    %v1418 = vld [vmem:[%s8 + $0x268] sm:$0xff]
    %v1419 = vld [vmem:[%s8 + $0x270] sm:$0xff]
    %v1420 = vld [vmem:[%s8 + $0x278] sm:$0xff]
    %v1421 = vld [vmem:[%s8 + $0x280] sm:$0xff]
    %v1422 = vld [vmem:[%s8 + $0x288] sm:$0xff]
    %v1423 = vld [vmem:[%s8 + $0x290] sm:$0xff]
    %v1424 = vld [vmem:[%s8 + $0x298] sm:$0xff]
    %v1425 = vld [vmem:[%s8 + $0x2a0] sm:$0xff]
    %v1426 = vld [vmem:[%s8 + $0x2a8] sm:$0xff]
    %v1427 = vld [vmem:[%s8 + $0x2b0] sm:$0xff]
    %v1428 = vld [vmem:[%s8 + $0x2b8] sm:$0xff]
    %v1429 = vld [vmem:[%s8 + $0x2c0] sm:$0xff]
    %v1430 = vld [vmem:[%s8 + $0x2c8] sm:$0xff]
    %v1431 = vld [vmem:[%s8 + $0x2d0] sm:$0xff]
    %v1432 = vld [vmem:[%s8 + $0x2d8] sm:$0xff]
    %v1433 = vld [vmem:[%s8 + $0x2e0] sm:$0xff]
    %v1434 = vld [vmem:[%s8 + $0x2e8] sm:$0xff]
    %v1435 = vld [vmem:[%s8 + $0x2f0] sm:$0xff]
    %v1436 = vld [vmem:[%s8 + $0x2f8] sm:$0xff]
    %v1437 = vld [vmem:[%s8 + $0x300] sm:$0xff]
    %v1438 = vld [vmem:[%s8 + $0x308] sm:$0xff]
    %v1439 = vld [vmem:[%s8 + $0x310] sm:$0xff]
    %v1440 = vld [vmem:[%s8 + $0x318] sm:$0xff]
    %v1441 = vld [vmem:[%s8 + $0x320] sm:$0xff]
    %v1442 = vld [vmem:[%s8 + $0x328] sm:$0xff]
    %v1443 = vld [vmem:[%s8 + $0x330] sm:$0xff]
    %v1444 = vld [vmem:[%s8 + $0x338] sm:$0xff]
    %v1445 = vld [vmem:[%s8 + $0x340] sm:$0xff]
    %v1446 = vld [vmem:[%s8 + $0x348] sm:$0xff]
    %v1447 = vld [vmem:[%s8 + $0x350] sm:$0xff]
    %v1448 = vld [vmem:[%s8 + $0x358] sm:$0xff]
    %v1449 = vld [vmem:[%s8 + $0x360] sm:$0xff]
    %v1450 = vld [vmem:[%s8 + $0x368] sm:$0xff]
    %v1451 = vld [vmem:[%s8 + $0x370] sm:$0xff]
    %v1452 = vld [vmem:[%s8 + $0x378] sm:$0xff]
    %v1453 = vld [vmem:[%s8 + $0x380] sm:$0xff]
    %v1454 = vld [vmem:[%s8 + $0x388] sm:$0xff]
    %v1455 = vld [vmem:[%s8 + $0x390] sm:$0xff]
    %v1456 = vld [vmem:[%s8 + $0x398] sm:$0xff]
    %v1457 = vld [vmem:[%s8 + $0x3a0] sm:$0xff]
    %v1458 = vld [vmem:[%s8 + $0x3a8] sm:$0xff]
    %v1459 = vld [vmem:[%s8 + $0x3b0] sm:$0xff]
    %v1460 = vld [vmem:[%s8 + $0x3b8] sm:$0xff]
    %v1461 = vld [vmem:[%s8 + $0x3c0] sm:$0xff]
    %v1462 = vld [vmem:[%s8 + $0x3c8] sm:$0xff]
    %v1463 = vld [vmem:[%s8 + $0x3d0] sm:$0xff]
    %v1464 = vld [vmem:[%s8 + $0x3d8] sm:$0xff]
    %v1465 = vld [vmem:[%s8 + $0x3e0] sm:$0xff]
    %v1466 = vld [vmem:[%s8 + $0x3e8] sm:$0xff]
    %v1467 = vld [vmem:[%s8 + $0x3f0] sm:$0xff]
    %v1468 = vld [vmem:[%s8 + $0x3f8] sm:$0xff]
    %v1469 = vld [vmem:[%s8 + $0x400] sm:$0xff]
    %v1470 = vld [vmem:[%s8 + $0x408] sm:$0xff]
    %v1471 = vld [vmem:[%s8 + $0x410] sm:$0xff]
    %v1472 = vld [vmem:[%s8 + $0x418] sm:$0xff]
    %v1473 = vld [vmem:[%s8 + $0x420] sm:$0xff]
    %v1474 = vld [vmem:[%s8 + $0x428] sm:$0xff]
    %v1475 = vld [vmem:[%s8 + $0x430] sm:$0xff]
    %v1476 = vld [vmem:[%s8 + $0x438] sm:$0xff]
    %v1477 = vld [vmem:[%s8 + $0x440] sm:$0xff]
    %v1478 = vld [vmem:[%s8 + $0x448] sm:$0xff]
    %v1479 = vld [vmem:[%s8 + $0x450] sm:$0xff]
    %v1480 = vld [vmem:[%s8 + $0x458] sm:$0xff]
    %v1481 = vld [vmem:[%s8 + $0x460] sm:$0xff]
    %v1482 = vld [vmem:[%s8 + $0x468] sm:$0xff]
    %v1483 = vld [vmem:[%s8 + $0x470] sm:$0xff]
    %v1484 = vld [vmem:[%s8 + $0x478] sm:$0xff]
    %v1485 = vld [vmem:[%s8 + $0x480] sm:$0xff]
    %v1486 = vld [vmem:[%s8 + $0x488] sm:$0xff]
    %v1487 = vld [vmem:[%s8 + $0x490] sm:$0xff]
    %v1488 = vld [vmem:[%s8 + $0x498] sm:$0xff]
    %v1489 = vld [vmem:[%s8 + $0x4a0] sm:$0xff]
    %v1490 = vld [vmem:[%s8 + $0x4a8] sm:$0xff]
    %v1491 = vld [vmem:[%s8 + $0x4b0] sm:$0xff]
    %v1492 = vld [vmem:[%s8 + $0x4b8] sm:$0xff]
    %v1493 = vld [vmem:[%s8 + $0x4c0] sm:$0xff]
    %v1494 = vld [vmem:[%s8 + $0x4c8] sm:$0xff]
    %v1495 = vld [vmem:[%s8 + $0x4d0] sm:$0xff]
    %v1496 = vld [vmem:[%s8 + $0x4d8] sm:$0xff]
    %v1497 = vld [vmem:[%s8 + $0x4e0] sm:$0xff]
    %v1498 = vld [vmem:[%s8 + $0x4e8] sm:$0xff]
    %v1499 = vld [vmem:[%s8 + $0x4f0] sm:$0xff]
    %v1500 = vld [vmem:[%s8 + $0x4f8] sm:$0xff]
    %v1501 = vld [vmem:[%s8 + $0x500] sm:$0xff]
    %v1502 = vld [vmem:[%s8 + $0x508] sm:$0xff]
    %v1503 = vld [vmem:[%s8 + $0x510] sm:$0xff]
    %v1504 = vld [vmem:[%s8 + $0x518] sm:$0xff]
    %v1505 = vld [vmem:[%s8 + $0x520] sm:$0xff]
    %v1506 = vld [vmem:[%s8 + $0x528] sm:$0xff]
    %v1507 = vld [vmem:[%s8 + $0x530] sm:$0xff]
    %v1508 = vld [vmem:[%s8 + $0x538] sm:$0xff]
    %v1509 = vld [vmem:[%s8 + $0x540] sm:$0xff]
    %v1510 = vld [vmem:[%s8 + $0x548] sm:$0xff]
    %v1511 = vld [vmem:[%s8 + $0x550] sm:$0xff]
    %v1512 = vld [vmem:[%s8 + $0x558] sm:$0xff]
    %v1513 = vld [vmem:[%s8 + $0x560] sm:$0xff]
    %v1514 = vld [vmem:[%s8 + $0x568] sm:$0xff]
    %v1515 = vld [vmem:[%s8 + $0x570] sm:$0xff]
    %v1516 = vld [vmem:[%s8 + $0x578] sm:$0xff]
    %v1517 = vld [vmem:[%s8 + $0x580] sm:$0xff]
    %v1518 = vld [vmem:[%s8 + $0x588] sm:$0xff]
    %v1519 = vld [vmem:[%s8 + $0x590] sm:$0xff]
    %v1520 = vld [vmem:[%s8 + $0x598] sm:$0xff]
    %v1521 = vld [vmem:[%s8 + $0x5a0] sm:$0xff]
    %v1522 = vld [vmem:[%s8 + $0x5a8] sm:$0xff]
    %v1523 = vld [vmem:[%s8 + $0x5b0] sm:$0xff]
    %v1524 = vld [vmem:[%s8 + $0x5b8] sm:$0xff]
    %v1525 = vld [vmem:[%s8 + $0x5c0] sm:$0xff]
    %v1526 = vld [vmem:[%s8 + $0x5c8] sm:$0xff]
    %v1527 = vld [vmem:[%s8 + $0x5d0] sm:$0xff]
    %v1528 = vld [vmem:[%s8 + $0x5d8] sm:$0xff]
    %v1529 = vld [vmem:[%s8 + $0x5e0] sm:$0xff]
    %v1530 = vld [vmem:[%s8 + $0x5e8] sm:$0xff]
    %v1531 = vld [vmem:[%s8 + $0x5f0] sm:$0xff]
    %v1532 = vld [vmem:[%s8 + $0x5f8] sm:$0xff]
    %v1533 = vld [vmem:[%s8 + $0x600] sm:$0xff]
    %v1534 = vld [vmem:[%s8 + $0x608] sm:$0xff]
    %v1535 = vld [vmem:[%s8 + $0x610] sm:$0xff]
    %v1536 = vld [vmem:[%s8 + $0x618] sm:$0xff]
    %v1537 = vld [vmem:[%s8 + $0x620] sm:$0xff]
    %v1538 = vld [vmem:[%s8 + $0x628] sm:$0xff]
    %v1539 = vld [vmem:[%s8 + $0x630] sm:$0xff]
    %v1540 = vld [vmem:[%s8 + $0x638] sm:$0xff]
    %v1541 = vld [vmem:[%s8 + $0x640] sm:$0xff]
    %v1542 = vld [vmem:[%s8 + $0x648] sm:$0xff]
    %v1543 = vld [vmem:[%s8 + $0x650] sm:$0xff]
    %v1544 = vld [vmem:[%s8 + $0x658] sm:$0xff]
    %v1545 = vld [vmem:[%s8 + $0x660] sm:$0xff]
    %v1546 = vld [vmem:[%s8 + $0x668] sm:$0xff]
    %v1547 = vld [vmem:[%s8 + $0x670] sm:$0xff]
    %v1548 = vld [vmem:[%s8 + $0x678] sm:$0xff]
    %v1549 = vld [vmem:[%s8 + $0x680] sm:$0xff]
    %v1550 = vld [vmem:[%s8 + $0x688] sm:$0xff]
    %v1551 = vld [vmem:[%s8 + $0x690] sm:$0xff]
    %v1552 = vld [vmem:[%s8 + $0x698] sm:$0xff]
    %v1553 = vld [vmem:[%s8 + $0x6a0] sm:$0xff]
    %v1554 = vld [vmem:[%s8 + $0x6a8] sm:$0xff]
    %v1555 = vld [vmem:[%s8 + $0x6b0] sm:$0xff]
    %v1556 = vld [vmem:[%s8 + $0x6b8] sm:$0xff]
    %v1557 = vld [vmem:[%s8 + $0x6c0] sm:$0xff]
    %v1558 = vld [vmem:[%s8 + $0x6c8] sm:$0xff]
    %v1559 = vld [vmem:[%s8 + $0x6d0] sm:$0xff]
    %v1560 = vld [vmem:[%s8 + $0x6d8] sm:$0xff]
    %v1561 = vld [vmem:[%s8 + $0x6e0] sm:$0xff]
    %v1562 = vld [vmem:[%s8 + $0x6e8] sm:$0xff]
    %v1563 = vld [vmem:[%s8 + $0x6f0] sm:$0xff]
    %v1564 = vld [vmem:[%s8 + $0x6f8] sm:$0xff]
    %v1565 = vld [vmem:[%s8 + $0x700] sm:$0xff]
    %v1566 = vld [vmem:[%s8 + $0x708] sm:$0xff]
    %v1567 = vld [vmem:[%s8 + $0x710] sm:$0xff]
    %v1568 = vld [vmem:[%s8 + $0x718] sm:$0xff]
    %v1569 = vld [vmem:[%s8 + $0x720] sm:$0xff]
    %v1570 = vld [vmem:[%s8 + $0x728] sm:$0xff]
    %v1571 = vld [vmem:[%s8 + $0x730] sm:$0xff]
    %v1572 = vld [vmem:[%s8 + $0x738] sm:$0xff]
    %v1573 = vld [vmem:[%s8 + $0x740] sm:$0xff]
    %v1574 = vld [vmem:[%s8 + $0x748] sm:$0xff]
    %v1575 = vld [vmem:[%s8 + $0x750] sm:$0xff]
    %v1576 = vld [vmem:[%s8 + $0x758] sm:$0xff]
    %v1577 = vld [vmem:[%s8 + $0x760] sm:$0xff]
    %v1578 = vld [vmem:[%s8 + $0x768] sm:$0xff]
    %v1579 = vld [vmem:[%s8 + $0x770] sm:$0xff]
    %v1580 = vld [vmem:[%s8 + $0x778] sm:$0xff]
    %v1581 = vld [vmem:[%s8 + $0x780] sm:$0xff]
    %v1582 = vld [vmem:[%s8 + $0x788] sm:$0xff]
    %v1583 = vld [vmem:[%s8 + $0x790] sm:$0xff]
    %v1584 = vld [vmem:[%s8 + $0x798] sm:$0xff]
    %v1585 = vld [vmem:[%s8 + $0x7a0] sm:$0xff]
    %v1586 = vld [vmem:[%s8 + $0x7a8] sm:$0xff]
    %v1587 = vld [vmem:[%s8 + $0x7b0] sm:$0xff]
    %v1588 = vld [vmem:[%s8 + $0x7b8] sm:$0xff]
    %v1589 = vld [vmem:[%s8 + $0x7c0] sm:$0xff]
    %v1590 = vld [vmem:[%s8 + $0x7c8] sm:$0xff]
    %v1591 = vld [vmem:[%s8 + $0x7d0] sm:$0xff]
    %v1592 = vld [vmem:[%s8 + $0x7d8] sm:$0xff]
    %v1593 = vld [vmem:[%s8 + $0x7e0] sm:$0xff]
    %v1594 = vld [vmem:[%s8 + $0x7e8] sm:$0xff]
    %v1595 = vld [vmem:[%s8 + $0x7f0] sm:$0xff]
    %v1596 = vld [vmem:[%s8 + $0x7f8] sm:$0xff]
    %v1597 = vld [vmem:[%s8 + $0x800] sm:$0xff]
    %v1598 = vld [vmem:[%s8 + $0x808] sm:$0xff]
    %v1599 = vld [vmem:[%s8 + $0x810] sm:$0xff]
    %v1600 = vld [vmem:[%s8 + $0x818] sm:$0xff]
    %v1601 = vld [vmem:[%s8 + $0x820] sm:$0xff]
    %v1602 = vld [vmem:[%s8 + $0x828] sm:$0xff]
    %v1603 = vld [vmem:[%s8 + $0x830] sm:$0xff]
    %v1604 = vld [vmem:[%s8 + $0x838] sm:$0xff]
    %v1605 = vld [vmem:[%s8 + $0x840] sm:$0xff]
    %v1606 = vld [vmem:[%s8 + $0x848] sm:$0xff]
    %v1607 = vld [vmem:[%s8 + $0x850] sm:$0xff]
    %v1608 = vld [vmem:[%s8 + $0x858] sm:$0xff]
    %v1609 = vld [vmem:[%s8 + $0x860] sm:$0xff]
    %v1610 = vld [vmem:[%s8 + $0x868] sm:$0xff]
    %v1611 = vld [vmem:[%s8 + $0x870] sm:$0xff]
    %v1612 = vld [vmem:[%s8 + $0x878] sm:$0xff]
    %v1613 = vld [vmem:[%s8 + $0x880] sm:$0xff]
    %v1614 = vld [vmem:[%s8 + $0x888] sm:$0xff]
    %v1615 = vld [vmem:[%s8 + $0x890] sm:$0xff]
    %v1616 = vld [vmem:[%s8 + $0x898] sm:$0xff]
    %v1617 = vld [vmem:[%s8 + $0x8a0] sm:$0xff]
    %v1618 = vld [vmem:[%s8 + $0x8a8] sm:$0xff]
    %v1619 = vld [vmem:[%s8 + $0x8b0] sm:$0xff]
    %v1620 = vld [vmem:[%s8 + $0x8b8] sm:$0xff]
    %v1621 = vld [vmem:[%s8 + $0x8c0] sm:$0xff]
    %v1622 = vld [vmem:[%s8 + $0x8c8] sm:$0xff]
    %v1623 = vld [vmem:[%s8 + $0x8d0] sm:$0xff]
    %v1624 = vld [vmem:[%s8 + $0x8d8] sm:$0xff]
    %v1625 = vld [vmem:[%s8 + $0x8e0] sm:$0xff]
    %v1626 = vld [vmem:[%s8 + $0x8e8] sm:$0xff]
    %v1627 = vld [vmem:[%s8 + $0x8f0] sm:$0xff]
    %v1628 = vld [vmem:[%s8 + $0x8f8] sm:$0xff]
    %v1629 = vld [vmem:[%s8 + $0x900] sm:$0xff]
    %v1630 = vld [vmem:[%s8 + $0x908] sm:$0xff]
    %v1631 = vld [vmem:[%s8 + $0x910] sm:$0xff]
    %v1632 = vld [vmem:[%s8 + $0x918] sm:$0xff]
    %v1633 = vld [vmem:[%s8 + $0x920] sm:$0xff]
    %v1634 = vld [vmem:[%s8 + $0x928] sm:$0xff]
    %v1635 = vld [vmem:[%s8 + $0x930] sm:$0xff]
    %v1636 = vld [vmem:[%s8 + $0x938] sm:$0xff]
    %v1637 = vld [vmem:[%s8 + $0x940] sm:$0xff]
    %v1638 = vld [vmem:[%s8 + $0x948] sm:$0xff]
    %v1639 = vld [vmem:[%s8 + $0x950] sm:$0xff]
    %v1640 = vld [vmem:[%s8 + $0x958] sm:$0xff]
    %v1641 = vld [vmem:[%s8 + $0x960] sm:$0xff]
    %v1642 = vld [vmem:[%s8 + $0x968] sm:$0xff]
    %v1643 = vld [vmem:[%s8 + $0x970] sm:$0xff]
    %v1644 = vld [vmem:[%s8 + $0x978] sm:$0xff]
    %v1645 = vld [vmem:[%s8 + $0x980] sm:$0xff]
    %v1646 = vld [vmem:[%s8 + $0x988] sm:$0xff]
    %v1647 = vld [vmem:[%s8 + $0x990] sm:$0xff]
    %v1648 = vld [vmem:[%s8 + $0x998] sm:$0xff]
    %v1649 = vld [vmem:[%s8 + $0x9a0] sm:$0xff]
    %v1650 = vld [vmem:[%s8 + $0x9a8] sm:$0xff]
    %v1651 = vld [vmem:[%s8 + $0x9b0] sm:$0xff]
    %v1652 = vld [vmem:[%s8 + $0x9b8] sm:$0xff]
    %v1653 = vld [vmem:[%s8 + $0x9c0] sm:$0xff]
    %v1654 = vld [vmem:[%s8 + $0x9c8] sm:$0xff]
    %v1655 = vld [vmem:[%s8 + $0x9d0] sm:$0xff]
    %v1656 = vld [vmem:[%s8 + $0x9d8] sm:$0xff]
    %v1657 = vld [vmem:[%s8 + $0x9e0] sm:$0xff]
    %v1658 = vld [vmem:[%s8 + $0x9e8] sm:$0xff]
    %v1659 = vld [vmem:[%s8 + $0x9f0] sm:$0xff]
    %v1660 = vld [vmem:[%s8 + $0x9f8] sm:$0xff]
    %v1661 = vld [vmem:[%s8 + $0xa00] sm:$0xff]
    %v1662 = vld [vmem:[%s8 + $0xa08] sm:$0xff]
    %v1663 = vld [vmem:[%s8 + $0xa10] sm:$0xff]
    %v1664 = vld [vmem:[%s8 + $0xa18] sm:$0xff]
    %v1665 = vld [vmem:[%s8 + $0xa20] sm:$0xff]
    %v1666 = vld [vmem:[%s8 + $0xa28] sm:$0xff]
    %v1667 = vld [vmem:[%s8 + $0xa30] sm:$0xff]
    %v1668 = vld [vmem:[%s8 + $0xa38] sm:$0xff]
    %v1669 = vld [vmem:[%s8 + $0xa40] sm:$0xff]
    %v1670 = vld [vmem:[%s8 + $0xa48] sm:$0xff]
    %v1671 = vld [vmem:[%s8 + $0xa50] sm:$0xff]
    %v1672 = vld [vmem:[%s8 + $0xa58] sm:$0xff]
    %v1673 = vld [vmem:[%s8 + $0xa60] sm:$0xff]
    %v1674 = vld [vmem:[%s8 + $0xa68] sm:$0xff]
    %v1675 = vld [vmem:[%s8 + $0xa70] sm:$0xff]
    %v1676 = vld [vmem:[%s8 + $0xa78] sm:$0xff]
    %v1677 = vld [vmem:[%s8 + $0xa80] sm:$0xff]
    %v1678 = vld [vmem:[%s8 + $0xa88] sm:$0xff]
    %v1679 = vld [vmem:[%s8 + $0xa90] sm:$0xff]
    %v1680 = vld [vmem:[%s8 + $0xa98] sm:$0xff]
    %v1681 = vld [vmem:[%s8 + $0xaa0] sm:$0xff]
    %v1682 = vld [vmem:[%s8 + $0xaa8] sm:$0xff]
    %v1683 = vld [vmem:[%s8 + $0xab0] sm:$0xff]
    %v1684 = vld [vmem:[%s8 + $0xab8] sm:$0xff]
    %v1685 = vld [vmem:[%s8 + $0xac0] sm:$0xff]
    %v1686 = vld [vmem:[%s8 + $0xac8] sm:$0xff]
    %v1687 = vld [vmem:[%s8 + $0xad0] sm:$0xff]
    %v1688 = vld [vmem:[%s8 + $0xad8] sm:$0xff]
    %v1689 = vld [vmem:[%s8 + $0xae0] sm:$0xff]
    %v1690 = vld [vmem:[%s8 + $0xae8] sm:$0xff]
    %v1691 = vld [vmem:[%s9] sm:$0x7f]
    %v1693 = vlaneseq
    %v1694 = vshrl.u32 %v1693, 7
    %v1695 = vsub.s32 0, %v1694
    %v1696 = vrot.slane %v1691, %v1695
    %v1697 = vlaneseq
    %v1698 = vshrl.u32 %v1697, 7
    %v1699 = vsub.s32 1, %v1698
    %v1700 = vrot.slane %v1691, %v1699
    %v1701 = vlaneseq
    %v1702 = vshrl.u32 %v1701, 7
    %v1703 = vsub.s32 2, %v1702
    %v1704 = vrot.slane %v1691, %v1703
    %v1705 = vlaneseq
    %v1706 = vshrl.u32 %v1705, 7
    %v1707 = vsub.s32 3, %v1706
    %v1708 = vrot.slane %v1691, %v1707
    %v1709 = vlaneseq
    %v1710 = vshrl.u32 %v1709, 7
    %v1711 = vsub.s32 4, %v1710
    %v1712 = vrot.slane %v1691, %v1711
    %v1713 = vlaneseq
    %v1714 = vshrl.u32 %v1713, 7
    %v1715 = vsub.s32 5, %v1714
    %v1716 = vrot.slane %v1691, %v1715
    %v1717 = vlaneseq
    %v1718 = vshrl.u32 %v1717, 7
    %v1719 = vsub.s32 6, %v1718
    %v1720 = vrot.slane %v1691, %v1719
    %v1729 = vsel %vm459, %v1340, 0
    %1731 = vmatprep.subr.mxu0 %v1342
    %1732 = vmatpush1.msra.mxu0 %v1341
    %1733 = vmatprep.subr.mxu0 %v1349
    %1734 = vmatpush1.msra.mxu0 %v1348
    %1735 = vmatprep.subr.mxu0 %v1356
    %1736 = vmatpush1.msra.mxu0 %v1355
    %1737 = vmatprep.subr.mxu0 %v1363
    %1738 = vmatpush1.msra.mxu0 %v1362
    %1739 = vmatprep.subr.mxu0 %v1370
    %1740 = vmatpush1.msra.mxu0 %v1369
    %1741 = vmatprep.subr.mxu0 %v1377
    %1742 = vmatpush1.msra.mxu0 %v1376
    %1743 = vmatprep.subr.mxu0 %v1384
    %1744 = vmatpush1.msra.mxu0 %v1383
    %1745 = vmatprep.subr.mxu0 %v1391
    %1746 = vmatpush1.msra.mxu0 %v1390
    %1747 = vmatprep.subr.mxu0 %v1398
    %1748 = vmatpush1.msra.mxu0 %v1397
    %1749 = vmatprep.subr.mxu0 %v1405
    %1750 = vmatpush1.msra.mxu0 %v1404
    %1751 = vmatprep.subr.mxu0 %v1412
    %1752 = vmatpush1.msra.mxu0 %v1411
    %1753 = vmatprep.subr.mxu0 %v1419
    %1754 = vmatpush1.msra.mxu0 %v1418
    %1755 = vmatprep.subr.mxu0 %v1426
    %1756 = vmatpush1.msra.mxu0 %v1425
    %1757 = vmatprep.subr.mxu0 %v1433
    %1758 = vmatpush1.msra.mxu0 %v1432
    %1759 = vmatprep.subr.mxu0 %v1440
    %1760 = vmatpush1.msra.mxu0 %v1439
    %1761 = vmatprep.subr.mxu0 %v1447
    %1762 = vmatpush1.msra.mxu0 %v1446
    %1763 = vmatprep.subr.mxu0 %v1454
    %1764 = vmatpush1.msra.mxu0 %v1453
    %1765 = vmatprep.subr.mxu0 %v1461
    %1766 = vmatpush1.msra.mxu0 %v1460
    %1767 = vmatprep.subr.mxu0 %v1468
    %1768 = vmatpush1.msra.mxu0 %v1467
    %1769 = vmatprep.subr.mxu0 %v1475
    %1770 = vmatpush1.msra.mxu0 %v1474
    %1771 = vmatprep.subr.mxu0 %v1482
    %1772 = vmatpush1.msra.mxu0 %v1481
    %1773 = vmatprep.subr.mxu0 %v1489
    %1774 = vmatpush1.msra.mxu0 %v1488
    %1775 = vmatprep.subr.mxu0 %v1496
    %1776 = vmatpush1.msra.mxu0 %v1495
    %1777 = vmatprep.subr.mxu0 %v1503
    %1778 = vmatpush1.msra.mxu0 %v1502
    %1779 = vmatprep.subr.mxu0 %v1510
    %1780 = vmatpush1.msra.mxu0 %v1509
    %1781 = vmatprep.subr.mxu0 %v1517
    %1782 = vmatpush1.msra.mxu0 %v1516
    %1783 = vmatprep.subr.mxu0 %v1524
    %1784 = vmatpush1.msra.mxu0 %v1523
    %1785 = vmatprep.subr.mxu0 %v1531
    %1786 = vmatpush1.msra.mxu0 %v1530
    %1787 = vmatprep.subr.mxu0 %v1538
    %1788 = vmatpush1.msra.mxu0 %v1537
    %1789 = vmatprep.subr.mxu0 %v1545
    %1790 = vmatpush1.msra.mxu0 %v1544
    %1791 = vmatprep.subr.mxu0 %v1552
    %1792 = vmatpush1.msra.mxu0 %v1551
    %1793 = vmatprep.subr.mxu0 %v1559
    %1794 = vmatpush1.msra.mxu0 %v1558
    %1795 = vmatprep.mubr.f32.mxu0 %v1338
    %1796 = vmatmul.mubr.f32.gmra.mrb[0].mxu0 %v1337
    %v1797 = vpop.f32.mrb[0].mxu0
    %v1798 = vadd.f32 %v1696, %v1797
    %v1799 = vpop.f32.mrb[0].mxu0
    %v1800 = vadd.f32 %v1700, %v1799
    %1801 = vdwg.mxu0
    %1802 = vmatprep.subr.mxu0 %v1566
    %1803 = vmatpush1.msra.mxu0 %v1565
    %1804 = vmatprep.subr.mxu0 %v1573
    %1805 = vmatpush1.msra.mxu0 %v1572
    %1806 = vmatprep.subr.mxu0 %v1580
    %1807 = vmatpush1.msra.mxu0 %v1579
    %1808 = vmatprep.subr.mxu0 %v1587
    %1809 = vmatpush1.msra.mxu0 %v1586
    %1810 = vmatprep.subr.mxu0 %v1594
    %1811 = vmatpush1.msra.mxu0 %v1593
    %1812 = vmatprep.subr.mxu0 %v1601
    %1813 = vmatpush1.msra.mxu0 %v1600
    %1814 = vmatprep.subr.mxu0 %v1608
    %1815 = vmatpush1.msra.mxu0 %v1607
    %1816 = vmatprep.subr.mxu0 %v1615
    %1817 = vmatpush1.msra.mxu0 %v1614
    %1818 = vmatprep.subr.mxu0 %v1622
    %1819 = vmatpush1.msra.mxu0 %v1621
    %1820 = vmatprep.subr.mxu0 %v1629
    %1821 = vmatpush1.msra.mxu0 %v1628
    %1822 = vmatprep.subr.mxu0 %v1636
    %1823 = vmatpush1.msra.mxu0 %v1635
    %1824 = vmatprep.subr.mxu0 %v1643
    %1825 = vmatpush1.msra.mxu0 %v1642
    %1826 = vmatprep.subr.mxu0 %v1650
    %1827 = vmatpush1.msra.mxu0 %v1649
    %1828 = vmatprep.subr.mxu0 %v1657
    %1829 = vmatpush1.msra.mxu0 %v1656
    %1830 = vmatprep.subr.mxu0 %v1664
    %1831 = vmatpush1.msra.mxu0 %v1663
    %1832 = vmatprep.subr.mxu0 %v1671
    %1833 = vmatpush1.msra.mxu0 %v1670
    %1834 = vmatprep.subr.mxu0 %v1678
    %1835 = vmatpush1.msra.mxu0 %v1677
    %1836 = vmatprep.subr.mxu0 %v1685
    %1837 = vmatpush1.msra.mxu0 %v1684
    %1838 = vmatprep.subr.mxu0 0.0
    %1839 = vmatpush1.msra.mxu0 0.0
    %1840 = vmatprep.subr.mxu0 0.0
    %1841 = vmatpush1.msra.mxu0 0.0
    %1842 = vmatprep.subr.mxu0 0.0
    %1843 = vmatpush1.msra.mxu0 0.0
    %1844 = vmatprep.subr.mxu0 0.0
    %1845 = vmatpush1.msra.mxu0 0.0
    %1846 = vmatprep.subr.mxu0 0.0
    %1847 = vmatpush1.msra.mxu0 0.0
    %1848 = vmatprep.subr.mxu0 0.0
    %1849 = vmatpush1.msra.mxu0 0.0
    %1850 = vmatprep.subr.mxu0 0.0
    %1851 = vmatpush1.msra.mxu0 0.0
    %1852 = vmatprep.subr.mxu0 0.0
    %1853 = vmatpush1.msra.mxu0 0.0
    %1854 = vmatprep.subr.mxu0 0.0
    %1855 = vmatpush1.msra.mxu0 0.0
    %1856 = vmatprep.subr.mxu0 0.0
    %1857 = vmatpush1.msra.mxu0 0.0
    %1858 = vmatprep.subr.mxu0 0.0
    %1859 = vmatpush1.msra.mxu0 0.0
    %1860 = vmatprep.subr.mxu0 0.0
    %1861 = vmatpush1.msra.mxu0 0.0
    %1862 = vmatprep.subr.mxu0 0.0
    %1863 = vmatpush1.msra.mxu0 0.0
    %1864 = vmatprep.subr.mxu0 0.0
    %1865 = vmatpush1.msra.mxu0 0.0
    %1866 = vmatprep.mubr.f32.mxu0 %v1729
    %1867 = vmatmul.mubr.f32.gmra.mrb[0].mxu0 %v1339
    %v1868 = vpop.f32.mrb[0].mxu0
    %v1869 = vadd.f32 %v1798, %v1868
    %v1870 = vpop.f32.mrb[0].mxu0
    %v1871 = vadd.f32 %v1800, %v1870
    %1872 = vdwg.mxu0
    %1873 = vmatprep.subr.mxu0 %v1344
    %1874 = vmatpush1.msra.mxu0 %v1343
    %1875 = vmatprep.subr.mxu0 %v1351
    %1876 = vmatpush1.msra.mxu0 %v1350
    %1877 = vmatprep.subr.mxu0 %v1358
    %1878 = vmatpush1.msra.mxu0 %v1357
    %1879 = vmatprep.subr.mxu0 %v1365
    %1880 = vmatpush1.msra.mxu0 %v1364
    %1881 = vmatprep.subr.mxu0 %v1372
    %1882 = vmatpush1.msra.mxu0 %v1371
    %1883 = vmatprep.subr.mxu0 %v1379
    %1884 = vmatpush1.msra.mxu0 %v1378
    %1885 = vmatprep.subr.mxu0 %v1386
    %1886 = vmatpush1.msra.mxu0 %v1385
    %1887 = vmatprep.subr.mxu0 %v1393
    %1888 = vmatpush1.msra.mxu0 %v1392
    %1889 = vmatprep.subr.mxu0 %v1400
    %1890 = vmatpush1.msra.mxu0 %v1399
    %1891 = vmatprep.subr.mxu0 %v1407
    %1892 = vmatpush1.msra.mxu0 %v1406
    %1893 = vmatprep.subr.mxu0 %v1414
    %1894 = vmatpush1.msra.mxu0 %v1413
    %1895 = vmatprep.subr.mxu0 %v1421
    %1896 = vmatpush1.msra.mxu0 %v1420
    %1897 = vmatprep.subr.mxu0 %v1428
    %1898 = vmatpush1.msra.mxu0 %v1427
    %1899 = vmatprep.subr.mxu0 %v1435
    %1900 = vmatpush1.msra.mxu0 %v1434
    %1901 = vmatprep.subr.mxu0 %v1442
    %1902 = vmatpush1.msra.mxu0 %v1441
    %1903 = vmatprep.subr.mxu0 %v1449
    %1904 = vmatpush1.msra.mxu0 %v1448
    %1905 = vmatprep.subr.mxu0 %v1456
    %1906 = vmatpush1.msra.mxu0 %v1455
    %1907 = vmatprep.subr.mxu0 %v1463
    %1908 = vmatpush1.msra.mxu0 %v1462
    %1909 = vmatprep.subr.mxu0 %v1470
    %1910 = vmatpush1.msra.mxu0 %v1469
    %1911 = vmatprep.subr.mxu0 %v1477
    %1912 = vmatpush1.msra.mxu0 %v1476
    %1913 = vmatprep.subr.mxu0 %v1484
    %1914 = vmatpush1.msra.mxu0 %v1483
    %1915 = vmatprep.subr.mxu0 %v1491
    %1916 = vmatpush1.msra.mxu0 %v1490
    %1917 = vmatprep.subr.mxu0 %v1498
    %1918 = vmatpush1.msra.mxu0 %v1497
    %1919 = vmatprep.subr.mxu0 %v1505
    %1920 = vmatpush1.msra.mxu0 %v1504
    %1921 = vmatprep.subr.mxu0 %v1512
    %1922 = vmatpush1.msra.mxu0 %v1511
    %1923 = vmatprep.subr.mxu0 %v1519
    %1924 = vmatpush1.msra.mxu0 %v1518
    %1925 = vmatprep.subr.mxu0 %v1526
    %1926 = vmatpush1.msra.mxu0 %v1525
    %1927 = vmatprep.subr.mxu0 %v1533
    %1928 = vmatpush1.msra.mxu0 %v1532
    %1929 = vmatprep.subr.mxu0 %v1540
    %1930 = vmatpush1.msra.mxu0 %v1539
    %1931 = vmatprep.subr.mxu0 %v1547
    %1932 = vmatpush1.msra.mxu0 %v1546
    %1933 = vmatprep.subr.mxu0 %v1554
    %1934 = vmatpush1.msra.mxu0 %v1553
    %1935 = vmatprep.subr.mxu0 %v1561
    %1936 = vmatpush1.msra.mxu0 %v1560
    %1937 = vmatprep.mubr.f32.mxu0 %v1338
    %1938 = vmatmul.mubr.f32.gmra.mrb[0].mxu0 %v1337
    %v1939 = vpop.f32.mrb[0].mxu0
    %v1940 = vadd.f32 %v1704, %v1939
    %v1941 = vpop.f32.mrb[0].mxu0
    %v1942 = vadd.f32 %v1708, %v1941
    %1943 = vdwg.mxu0
    %1944 = vmatprep.subr.mxu0 %v1568
    %1945 = vmatpush1.msra.mxu0 %v1567
    %1946 = vmatprep.subr.mxu0 %v1575
    %1947 = vmatpush1.msra.mxu0 %v1574
    %1948 = vmatprep.subr.mxu0 %v1582
    %1949 = vmatpush1.msra.mxu0 %v1581
    %1950 = vmatprep.subr.mxu0 %v1589
    %1951 = vmatpush1.msra.mxu0 %v1588
    %1952 = vmatprep.subr.mxu0 %v1596
    %1953 = vmatpush1.msra.mxu0 %v1595
    %1954 = vmatprep.subr.mxu0 %v1603
    %1955 = vmatpush1.msra.mxu0 %v1602
    %1956 = vmatprep.subr.mxu0 %v1610
    %1957 = vmatpush1.msra.mxu0 %v1609
    %1958 = vmatprep.subr.mxu0 %v1617
    %1959 = vmatpush1.msra.mxu0 %v1616
    %1960 = vmatprep.subr.mxu0 %v1624
    %1961 = vmatpush1.msra.mxu0 %v1623
    %1962 = vmatprep.subr.mxu0 %v1631
    %1963 = vmatpush1.msra.mxu0 %v1630
    %1964 = vmatprep.subr.mxu0 %v1638
    %1965 = vmatpush1.msra.mxu0 %v1637
    %1966 = vmatprep.subr.mxu0 %v1645
    %1967 = vmatpush1.msra.mxu0 %v1644
    %1968 = vmatprep.subr.mxu0 %v1652
    %1969 = vmatpush1.msra.mxu0 %v1651
    %1970 = vmatprep.subr.mxu0 %v1659
    %1971 = vmatpush1.msra.mxu0 %v1658
    %1972 = vmatprep.subr.mxu0 %v1666
    %1973 = vmatpush1.msra.mxu0 %v1665
    %1974 = vmatprep.subr.mxu0 %v1673
    %1975 = vmatpush1.msra.mxu0 %v1672
    %1976 = vmatprep.subr.mxu0 %v1680
    %1977 = vmatpush1.msra.mxu0 %v1679
    %1978 = vmatprep.subr.mxu0 %v1687
    %1979 = vmatpush1.msra.mxu0 %v1686
    %1980 = vmatprep.subr.mxu0 0.0
    %1981 = vmatpush1.msra.mxu0 0.0
    %1982 = vmatprep.subr.mxu0 0.0
    %1983 = vmatpush1.msra.mxu0 0.0
    %1984 = vmatprep.subr.mxu0 0.0
    %1985 = vmatpush1.msra.mxu0 0.0
    %1986 = vmatprep.subr.mxu0 0.0
    %1987 = vmatpush1.msra.mxu0 0.0
    %1988 = vmatprep.subr.mxu0 0.0
    %1989 = vmatpush1.msra.mxu0 0.0
    %1990 = vmatprep.subr.mxu0 0.0
    %1991 = vmatpush1.msra.mxu0 0.0
    %1992 = vmatprep.subr.mxu0 0.0
    %1993 = vmatpush1.msra.mxu0 0.0
    %1994 = vmatprep.subr.mxu0 0.0
    %1995 = vmatpush1.msra.mxu0 0.0
    %1996 = vmatprep.subr.mxu0 0.0
    %1997 = vmatpush1.msra.mxu0 0.0
    %1998 = vmatprep.subr.mxu0 0.0
    %1999 = vmatpush1.msra.mxu0 0.0
    %2000 = vmatprep.subr.mxu0 0.0
    %2001 = vmatpush1.msra.mxu0 0.0
    %2002 = vmatprep.subr.mxu0 0.0
    %2003 = vmatpush1.msra.mxu0 0.0
    %2004 = vmatprep.subr.mxu0 0.0
    %2005 = vmatpush1.msra.mxu0 0.0
    %2006 = vmatprep.subr.mxu0 0.0
    %2007 = vmatpush1.msra.mxu0 0.0
    %2008 = vmatprep.mubr.f32.mxu0 %v1729
    %2009 = vmatmul.mubr.f32.gmra.mrb[0].mxu0 %v1339
    %v2010 = vpop.f32.mrb[0].mxu0
    %v2011 = vadd.f32 %v1940, %v2010
    %v2012 = vpop.f32.mrb[0].mxu0
    %v2013 = vadd.f32 %v1942, %v2012
    %2014 = vdwg.mxu0
    %2015 = vmatprep.subr.mxu0 %v1346
    %2016 = vmatpush1.msra.mxu0 %v1345
    %2017 = vmatprep.subr.mxu0 %v1353
    %2018 = vmatpush1.msra.mxu0 %v1352
    %2019 = vmatprep.subr.mxu0 %v1360
    %2020 = vmatpush1.msra.mxu0 %v1359
    %2021 = vmatprep.subr.mxu0 %v1367
    %2022 = vmatpush1.msra.mxu0 %v1366
    %2023 = vmatprep.subr.mxu0 %v1374
    %2024 = vmatpush1.msra.mxu0 %v1373
    %2025 = vmatprep.subr.mxu0 %v1381
    %2026 = vmatpush1.msra.mxu0 %v1380
    %2027 = vmatprep.subr.mxu0 %v1388
    %2028 = vmatpush1.msra.mxu0 %v1387
    %2029 = vmatprep.subr.mxu0 %v1395
    %2030 = vmatpush1.msra.mxu0 %v1394
    %2031 = vmatprep.subr.mxu0 %v1402
    %2032 = vmatpush1.msra.mxu0 %v1401
    %2033 = vmatprep.subr.mxu0 %v1409
    %2034 = vmatpush1.msra.mxu0 %v1408
    %2035 = vmatprep.subr.mxu0 %v1416
    %2036 = vmatpush1.msra.mxu0 %v1415
    %2037 = vmatprep.subr.mxu0 %v1423
    %2038 = vmatpush1.msra.mxu0 %v1422
    %2039 = vmatprep.subr.mxu0 %v1430
    %2040 = vmatpush1.msra.mxu0 %v1429
    %2041 = vmatprep.subr.mxu0 %v1437
    %2042 = vmatpush1.msra.mxu0 %v1436
    %2043 = vmatprep.subr.mxu0 %v1444
    %2044 = vmatpush1.msra.mxu0 %v1443
    %2045 = vmatprep.subr.mxu0 %v1451
    %2046 = vmatpush1.msra.mxu0 %v1450
    %2047 = vmatprep.subr.mxu0 %v1458
    %2048 = vmatpush1.msra.mxu0 %v1457
    %2049 = vmatprep.subr.mxu0 %v1465
    %2050 = vmatpush1.msra.mxu0 %v1464
    %2051 = vmatprep.subr.mxu0 %v1472
    %2052 = vmatpush1.msra.mxu0 %v1471
    %2053 = vmatprep.subr.mxu0 %v1479
    %2054 = vmatpush1.msra.mxu0 %v1478
    %2055 = vmatprep.subr.mxu0 %v1486
    %2056 = vmatpush1.msra.mxu0 %v1485
    %2057 = vmatprep.subr.mxu0 %v1493
    %2058 = vmatpush1.msra.mxu0 %v1492
    %2059 = vmatprep.subr.mxu0 %v1500
    %2060 = vmatpush1.msra.mxu0 %v1499
    %2061 = vmatprep.subr.mxu0 %v1507
    %2062 = vmatpush1.msra.mxu0 %v1506
    %2063 = vmatprep.subr.mxu0 %v1514
    %2064 = vmatpush1.msra.mxu0 %v1513
    %2065 = vmatprep.subr.mxu0 %v1521
    %2066 = vmatpush1.msra.mxu0 %v1520
    %2067 = vmatprep.subr.mxu0 %v1528
    %2068 = vmatpush1.msra.mxu0 %v1527
    %2069 = vmatprep.subr.mxu0 %v1535
    %2070 = vmatpush1.msra.mxu0 %v1534
    %2071 = vmatprep.subr.mxu0 %v1542
    %2072 = vmatpush1.msra.mxu0 %v1541
    %2073 = vmatprep.subr.mxu0 %v1549
    %2074 = vmatpush1.msra.mxu0 %v1548
    %2075 = vmatprep.subr.mxu0 %v1556
    %2076 = vmatpush1.msra.mxu0 %v1555
    %2077 = vmatprep.subr.mxu0 %v1563
    %2078 = vmatpush1.msra.mxu0 %v1562
    %2079 = vmatprep.mubr.f32.mxu0 %v1338
    %2080 = vmatmul.mubr.f32.gmra.mrb[0].mxu0 %v1337
    %v2081 = vpop.f32.mrb[0].mxu0
    %v2082 = vadd.f32 %v1712, %v2081
    %v2083 = vpop.f32.mrb[0].mxu0
    %v2084 = vadd.f32 %v1716, %v2083
    %2085 = vdwg.mxu0
    %2086 = vmatprep.subr.mxu0 %v1570
    %2087 = vmatpush1.msra.mxu0 %v1569
    %2088 = vmatprep.subr.mxu0 %v1577
    %2089 = vmatpush1.msra.mxu0 %v1576
    %2090 = vmatprep.subr.mxu0 %v1584
    %2091 = vmatpush1.msra.mxu0 %v1583
    %2092 = vmatprep.subr.mxu0 %v1591
    %2093 = vmatpush1.msra.mxu0 %v1590
    %2094 = vmatprep.subr.mxu0 %v1598
    %2095 = vmatpush1.msra.mxu0 %v1597
    %2096 = vmatprep.subr.mxu0 %v1605
    %2097 = vmatpush1.msra.mxu0 %v1604
    %2098 = vmatprep.subr.mxu0 %v1612
    %2099 = vmatpush1.msra.mxu0 %v1611
    %2100 = vmatprep.subr.mxu0 %v1619
    %2101 = vmatpush1.msra.mxu0 %v1618
    %2102 = vmatprep.subr.mxu0 %v1626
    %2103 = vmatpush1.msra.mxu0 %v1625
    %2104 = vmatprep.subr.mxu0 %v1633
    %2105 = vmatpush1.msra.mxu0 %v1632
    %2106 = vmatprep.subr.mxu0 %v1640
    %2107 = vmatpush1.msra.mxu0 %v1639
    %2108 = vmatprep.subr.mxu0 %v1647
    %2109 = vmatpush1.msra.mxu0 %v1646
    %2110 = vmatprep.subr.mxu0 %v1654
    %2111 = vmatpush1.msra.mxu0 %v1653
    %2112 = vmatprep.subr.mxu0 %v1661
    %2113 = vmatpush1.msra.mxu0 %v1660
    %2114 = vmatprep.subr.mxu0 %v1668
    %2115 = vmatpush1.msra.mxu0 %v1667
    %2116 = vmatprep.subr.mxu0 %v1675
    %2117 = vmatpush1.msra.mxu0 %v1674
    %2118 = vmatprep.subr.mxu0 %v1682
    %2119 = vmatpush1.msra.mxu0 %v1681
    %2120 = vmatprep.subr.mxu0 %v1689
    %2121 = vmatpush1.msra.mxu0 %v1688
    %2122 = vmatprep.subr.mxu0 0.0
    %2123 = vmatpush1.msra.mxu0 0.0
    %2124 = vmatprep.subr.mxu0 0.0
    %2125 = vmatpush1.msra.mxu0 0.0
    %2126 = vmatprep.subr.mxu0 0.0
    %2127 = vmatpush1.msra.mxu0 0.0
    %2128 = vmatprep.subr.mxu0 0.0
    %2129 = vmatpush1.msra.mxu0 0.0
    %2130 = vmatprep.subr.mxu0 0.0
    %2131 = vmatpush1.msra.mxu0 0.0
    %2132 = vmatprep.subr.mxu0 0.0
    %2133 = vmatpush1.msra.mxu0 0.0
    %2134 = vmatprep.subr.mxu0 0.0
    %2135 = vmatpush1.msra.mxu0 0.0
    %2136 = vmatprep.subr.mxu0 0.0
    %2137 = vmatpush1.msra.mxu0 0.0
    %2138 = vmatprep.subr.mxu0 0.0
    %2139 = vmatpush1.msra.mxu0 0.0
    %2140 = vmatprep.subr.mxu0 0.0
    %2141 = vmatpush1.msra.mxu0 0.0
    %2142 = vmatprep.subr.mxu0 0.0
    %2143 = vmatpush1.msra.mxu0 0.0
    %2144 = vmatprep.subr.mxu0 0.0
    %2145 = vmatpush1.msra.mxu0 0.0
    %2146 = vmatprep.subr.mxu0 0.0
    %2147 = vmatpush1.msra.mxu0 0.0
    %2148 = vmatprep.subr.mxu0 0.0
    %2149 = vmatpush1.msra.mxu0 0.0
    %2150 = vmatprep.mubr.f32.mxu0 %v1729
    %2151 = vmatmul.mubr.f32.gmra.mrb[0].mxu0 %v1339
    %v2152 = vpop.f32.mrb[0].mxu0
    %v2153 = vadd.f32 %v2082, %v2152
    %v2154 = vpop.f32.mrb[0].mxu0
    %v2155 = vadd.f32 %v2084, %v2154
    %2156 = vdwg.mxu0
    %2157 = vmatprep.subr.mxu0 0.0
    %2158 = vmatpush1.msra.mxu0 %v1347
    %2159 = vmatprep.subr.mxu0 0.0
    %2160 = vmatpush1.msra.mxu0 %v1354
    %2161 = vmatprep.subr.mxu0 0.0
    %2162 = vmatpush1.msra.mxu0 %v1361
    %2163 = vmatprep.subr.mxu0 0.0
    %2164 = vmatpush1.msra.mxu0 %v1368
    %2165 = vmatprep.subr.mxu0 0.0
    %2166 = vmatpush1.msra.mxu0 %v1375
    %2167 = vmatprep.subr.mxu0 0.0
    %2168 = vmatpush1.msra.mxu0 %v1382
    %2169 = vmatprep.subr.mxu0 0.0
    %2170 = vmatpush1.msra.mxu0 %v1389
    %2171 = vmatprep.subr.mxu0 0.0
    %2172 = vmatpush1.msra.mxu0 %v1396
    %2173 = vmatprep.subr.mxu0 0.0
    %2174 = vmatpush1.msra.mxu0 %v1403
    %2175 = vmatprep.subr.mxu0 0.0
    %2176 = vmatpush1.msra.mxu0 %v1410
    %2177 = vmatprep.subr.mxu0 0.0
    %2178 = vmatpush1.msra.mxu0 %v1417
    %2179 = vmatprep.subr.mxu0 0.0
    %2180 = vmatpush1.msra.mxu0 %v1424
    %2181 = vmatprep.subr.mxu0 0.0
    %2182 = vmatpush1.msra.mxu0 %v1431
    %2183 = vmatprep.subr.mxu0 0.0
    %2184 = vmatpush1.msra.mxu0 %v1438
    %2185 = vmatprep.subr.mxu0 0.0
    %2186 = vmatpush1.msra.mxu0 %v1445
    %2187 = vmatprep.subr.mxu0 0.0
    %2188 = vmatpush1.msra.mxu0 %v1452
    %2189 = vmatprep.subr.mxu0 0.0
    %2190 = vmatpush1.msra.mxu0 %v1459
    %2191 = vmatprep.subr.mxu0 0.0
    %2192 = vmatpush1.msra.mxu0 %v1466
    %2193 = vmatprep.subr.mxu0 0.0
    %2194 = vmatpush1.msra.mxu0 %v1473
    %2195 = vmatprep.subr.mxu0 0.0
    %2196 = vmatpush1.msra.mxu0 %v1480
    %2197 = vmatprep.subr.mxu0 0.0
    %2198 = vmatpush1.msra.mxu0 %v1487
    %2199 = vmatprep.subr.mxu0 0.0
    %2200 = vmatpush1.msra.mxu0 %v1494
    %2201 = vmatprep.subr.mxu0 0.0
    %2202 = vmatpush1.msra.mxu0 %v1501
    %2203 = vmatprep.subr.mxu0 0.0
    %2204 = vmatpush1.msra.mxu0 %v1508
    %2205 = vmatprep.subr.mxu0 0.0
    %2206 = vmatpush1.msra.mxu0 %v1515
    %2207 = vmatprep.subr.mxu0 0.0
    %2208 = vmatpush1.msra.mxu0 %v1522
    %2209 = vmatprep.subr.mxu0 0.0
    %2210 = vmatpush1.msra.mxu0 %v1529
    %2211 = vmatprep.subr.mxu0 0.0
    %2212 = vmatpush1.msra.mxu0 %v1536
    %2213 = vmatprep.subr.mxu0 0.0
    %2214 = vmatpush1.msra.mxu0 %v1543
    %2215 = vmatprep.subr.mxu0 0.0
    %2216 = vmatpush1.msra.mxu0 %v1550
    %2217 = vmatprep.subr.mxu0 0.0
    %2218 = vmatpush1.msra.mxu0 %v1557
    %2219 = vmatprep.subr.mxu0 0.0
    %2220 = vmatpush1.msra.mxu0 %v1564
    %2221 = vmatprep.mubr.f32.mxu0 %v1338
    %2222 = vmatmul.mubr.f32.gmra.mrb[0].mxu0 %v1337
    %v2223 = vpop.f32.mrb[0].mxu0
    %v2224 = vadd.f32 %v1720, %v2223
    %v2225 = vpop.f32.mrb[0].mxu0
    %2226 = vdwg.mxu0
    %2227 = vmatprep.subr.mxu0 0.0
    %2228 = vmatpush1.msra.mxu0 %v1571
    %2229 = vmatprep.subr.mxu0 0.0
    %2230 = vmatpush1.msra.mxu0 %v1578
    %2231 = vmatprep.subr.mxu0 0.0
    %2232 = vmatpush1.msra.mxu0 %v1585
    %2233 = vmatprep.subr.mxu0 0.0
    %2234 = vmatpush1.msra.mxu0 %v1592
    %2235 = vmatprep.subr.mxu0 0.0
    %2236 = vmatpush1.msra.mxu0 %v1599
    %2237 = vmatprep.subr.mxu0 0.0
    %2238 = vmatpush1.msra.mxu0 %v1606
    %2239 = vmatprep.subr.mxu0 0.0
    %2240 = vmatpush1.msra.mxu0 %v1613
    %2241 = vmatprep.subr.mxu0 0.0
    %2242 = vmatpush1.msra.mxu0 %v1620
    %2243 = vmatprep.subr.mxu0 0.0
    %2244 = vmatpush1.msra.mxu0 %v1627
    %2245 = vmatprep.subr.mxu0 0.0
    %2246 = vmatpush1.msra.mxu0 %v1634
    %2247 = vmatprep.subr.mxu0 0.0
    %2248 = vmatpush1.msra.mxu0 %v1641
    %2249 = vmatprep.subr.mxu0 0.0
    %2250 = vmatpush1.msra.mxu0 %v1648
    %2251 = vmatprep.subr.mxu0 0.0
    %2252 = vmatpush1.msra.mxu0 %v1655
    %2253 = vmatprep.subr.mxu0 0.0
    %2254 = vmatpush1.msra.mxu0 %v1662
    %2255 = vmatprep.subr.mxu0 0.0
    %2256 = vmatpush1.msra.mxu0 %v1669
    %2257 = vmatprep.subr.mxu0 0.0
    %2258 = vmatpush1.msra.mxu0 %v1676
    %2259 = vmatprep.subr.mxu0 0.0
    %2260 = vmatpush1.msra.mxu0 %v1683
    %2261 = vmatprep.subr.mxu0 0.0
    %2262 = vmatpush1.msra.mxu0 %v1690
    %2263 = vmatprep.subr.mxu0 0.0
    %2264 = vmatpush1.msra.mxu0 0.0
    %2265 = vmatprep.subr.mxu0 0.0
    %2266 = vmatpush1.msra.mxu0 0.0
    %2267 = vmatprep.subr.mxu0 0.0
    %2268 = vmatpush1.msra.mxu0 0.0
    %2269 = vmatprep.subr.mxu0 0.0
    %2270 = vmatpush1.msra.mxu0 0.0
    %2271 = vmatprep.subr.mxu0 0.0
    %2272 = vmatpush1.msra.mxu0 0.0
    %2273 = vmatprep.subr.mxu0 0.0
    %2274 = vmatpush1.msra.mxu0 0.0
    %2275 = vmatprep.subr.mxu0 0.0
    %2276 = vmatpush1.msra.mxu0 0.0
    %2277 = vmatprep.subr.mxu0 0.0
    %2278 = vmatpush1.msra.mxu0 0.0
    %2279 = vmatprep.subr.mxu0 0.0
    %2280 = vmatpush1.msra.mxu0 0.0
    %2281 = vmatprep.subr.mxu0 0.0
    %2282 = vmatpush1.msra.mxu0 0.0
    %2283 = vmatprep.subr.mxu0 0.0
    %2284 = vmatpush1.msra.mxu0 0.0
    %2285 = vmatprep.subr.mxu0 0.0
    %2286 = vmatpush1.msra.mxu0 0.0
    %2287 = vmatprep.subr.mxu0 0.0
    %2288 = vmatpush1.msra.mxu0 0.0
    %2289 = vmatprep.subr.mxu0 0.0
    %2290 = vmatpush1.msra.mxu0 0.0
    %2291 = vmatprep.mubr.f32.mxu0 %v1729
    %2292 = vmatmul.mubr.f32.gmra.mrb[0].mxu0 %v1339
    %v2293 = vpop.f32.mrb[0].mxu0
    %v2294 = vadd.f32 %v2224, %v2293
    %v2295 = vpop.f32.mrb[0].mxu0
    %2296 = vdwg.mxu0
    %v2297 = vxor.u32 %v1869, 2147483648
    %v2298 = vxor.u32 %v1871, 2147483648
    %v2299 = vxor.u32 %v2011, 2147483648
    %v2300 = vxor.u32 %v2013, 2147483648
    %v2301 = vxor.u32 %v2153, 2147483648
    %v2302 = vxor.u32 %v2155, 2147483648
    %v2303 = vxor.u32 %v2294, 2147483648
    %v2304 = vmul.f32 %v2297, 1.442695
    %v2305 = vpow.pop %v2304
    %v2306 = vmul.f32 %v2298, 1.442695
    %v2307 = vpow.pop %v2306
    %v2308 = vmul.f32 %v2299, 1.442695
    %v2309 = vpow.pop %v2308
    %v2310 = vmul.f32 %v2300, 1.442695
    %v2311 = vpow.pop %v2310
    %v2312 = vmul.f32 %v2301, 1.442695
    %v2313 = vpow.pop %v2312
    %v2314 = vmul.f32 %v2302, 1.442695
    %v2315 = vpow.pop %v2314
    %v2316 = vmul.f32 %v2303, 1.442695
    %v2317 = vpow.pop %v2316
    %v2318 = vadd.f32 %v2305, 1.0
    %v2319 = vadd.f32 %v2307, 1.0
    %v2320 = vadd.f32 %v2309, 1.0
    %v2321 = vadd.f32 %v2311, 1.0
    %v2322 = vadd.f32 %v2313, 1.0
    %v2323 = vadd.f32 %v2315, 1.0
    %v2324 = vadd.f32 %v2317, 1.0
    %v2325 = vrcp.pop %v2318
    %v2326 = vmul.f32 1.0, %v2325
    %v2327 = vrcp.pop %v2319
    %v2328 = vmul.f32 1.0, %v2327
    %v2329 = vrcp.pop %v2320
    %v2330 = vmul.f32 1.0, %v2329
    %v2331 = vrcp.pop %v2321
    %v2332 = vmul.f32 1.0, %v2331
    %v2333 = vrcp.pop %v2322
    %v2334 = vmul.f32 1.0, %v2333
    %v2335 = vrcp.pop %v2323
    %v2336 = vmul.f32 1.0, %v2335
    %v2337 = vrcp.pop %v2324
    %v2338 = vmul.f32 1.0, %v2337
    %2339 = vst [vmem:[#allocation2] sm:$0xff] %v2326
    %2340 = vst [vmem:[#allocation2 + $0x8] sm:$0xff] %v2328
    %2341 = vst [vmem:[#allocation2 + $0x10] sm:$0xff] %v2330
    %2342 = vst [vmem:[#allocation2 + $0x18] sm:$0xff] %v2332
    %2343 = vst [vmem:[#allocation2 + $0x20] sm:$0xff] %v2334
    %2344 = vst [vmem:[#allocation2 + $0x28] sm:$0xff] %v2336
    %2345 = vst.msk [vmem:[#allocation2 + $0x30] sm:$0xff] %vm459, %v2338
    %vm2346 = vcmask 31744
    %2347 = vst.msk [vmem:[%s11] sm:$0xff] %vm2346, %v1232
    // Predicated region
    $region42: #{vae_forward.1} parent=1 // pred_check
      _
    $region43: #{vae_forward.1} parent=1 // pred_check_branch
      %2349 = sbr.rel (0) target = $region45
    $region44: #{vae_forward.1} parent=1 // pred_region
      %s2351 = ssub.s32 896, 896
      %2352 = vsyncadd [#allocation3], %s2351
      %s2354 = sshll.u32 [#allocation2], 4
      %s2355 = int_to_ptr.vmem [resolvable:$true] %s2354
      %2357 = dma.vmem_to_hbm [thread:$0]  %s2355, 896, %s10, [#allocation3]
    $region45: #{vae_forward.1} parent=1 // pred_fallthru
      _
    // Predicated region
    $region46: #{vae_forward.1} parent=1 // pred_check
      _
    $region47: #{vae_forward.1} parent=1 // pred_check_branch
      %2359 = sbr.rel (0) target = $region49
    $region48: #{vae_forward.1} parent=1 // pred_region
      _
    $region49: #{vae_forward.1} parent=1 // pred_fallthru
      _
    // Predicated region
    $region50: #{vae_forward.1} parent=1 // pred_check
      _
    $region51: #{vae_forward.1} parent=1 // pred_check_branch
      %2361 = sbr.rel (0) target = $region53
    $region52: #{vae_forward.1} parent=1 // pred_region
      %2362 = dma.done [#allocation3], 896
    $region53: #{vae_forward.1} parent=1 // pred_fallthru
      _
    // Predicated region
    $region54: #{vae_forward.1} parent=1 // pred_check
      _
    $region55: #{vae_forward.1} parent=1 // pred_check_branch
      %2364 = sbr.rel (0) target = $region57
    $region56: #{vae_forward.1} parent=1 // pred_region
      _
    $region57: #{vae_forward.1} parent=1 // pred_fallthru
      _
    %2365 = vsyncpa [#allocation3], 1

</llo_original>
